<compile_context>
chip_gen: v7x
topology: tpu7x:2x2x1
jax: 0.10.0
libtpu: 0.0.40
codegen_flags: <defaults>
</compile_context>

<pallas_src>
import functools

import jax
import jax.numpy as jnp
from jax import lax
from jax.experimental import pallas as pl
from jax.experimental.pallas import tpu as pltpu


def _sigmoid(z):
    # exp -> EUP, approximate reciprocal -> EUP; keeps the divide off the VALU
    # critical path of the serial recurrence.
    return pl.reciprocal(1.0 + jnp.exp(-z), approx=True)


def _lstm_kernel(x_ref,      # VMEM (S_pad, D)   layer-0 input (gathered embeddings)
                 w_ih_ref,   # VMEM (1, D, 4H)   this layer's input->gates weights
                 w_hh_ref,   # VMEM (1, H, 4H)   this layer's recurrent weights
                 b_ref,      # VMEM (1, 1, 4H)   b_ih + b_hh
                 w_fc_ref,   # VMEM (D, Pp)      (rows >= H are zero)
                 b_fc_ref,   # VMEM (1, Pp)
                 h0_ref,     # VMEM (1, 1, H)
                 c0_ref,     # VMEM (1, 1, H)
                 out_ref,    # VMEM (S_pad, Pp)
                 x_buf,      # scratch VMEM (S_pad, D)  layer input / output (persists)
                 g_buf,      # scratch VMEM (S_pad, 4H) input->gates projection
                 *, hidden_dim, valid_pos):
    l = pl.program_id(0)
    num_layers = pl.num_programs(0)
    S_pad, D = x_buf.shape
    H = hidden_dim

    # ---- layer 0: load the (already gathered) embeddings into the work buffer
    @pl.when(l == 0)
    def _():
        x_buf[...] = x_ref[...]

    # ---- batched input->gates projection for the whole sequence (one MXU pass)
    g_buf[...] = (
        jnp.dot(x_buf[...], w_ih_ref[0], preferred_element_type=jnp.float32)
        + b_ref[0])

    # Hold this layer's recurrent weights as values across the time loop.
    w_hh = w_hh_ref[0]                                       # (H, 4H)

    def step(t, carry):
        h, c = carry                                         # (1, H) each
        gates = g_buf[pl.ds(t, 1), :] + jnp.dot(
            h, w_hh, preferred_element_type=jnp.float32)     # (1, 4H)
        i_g = _sigmoid(gates[:, 0 * H:1 * H])
        f_g = _sigmoid(gates[:, 1 * H:2 * H])
        g_g = jnp.tanh(gates[:, 2 * H:3 * H])
        o_g = _sigmoid(gates[:, 3 * H:4 * H])
        c = f_g * c + i_g * g_g
        h = o_g * jnp.tanh(c)
        # This layer's output row t becomes the next layer's input row t.
        if H == D:
            x_buf[pl.ds(t, 1), :] = h
        else:
            x_buf[pl.ds(t, 1), :H] = h        # lanes >= H hit zero W rows later
        return (h, c)

    lax.fori_loop(0, S_pad, step, (h0_ref[0], c0_ref[0]), unroll=8)

    # ---- last layer: fc + lane-dense masked log_softmax ---------------------
    @pl.when(l == num_layers - 1)
    def _():
        logits = (jnp.dot(x_buf[...], w_fc_ref[...],
                          preferred_element_type=jnp.float32) + b_fc_ref[...])
        col = lax.broadcasted_iota(jnp.int32, logits.shape, 1)
        logits = jnp.where(col < valid_pos, logits, -1e30)   # mask padded lanes
        m = jnp.max(logits, axis=-1, keepdims=True)
        shifted = logits - m
        lse = jnp.log(jnp.sum(jnp.exp(shifted), axis=-1, keepdims=True))
        out_ref[...] = shifted - lse


def _round_up(x, m):
    return (x + m - 1) // m * m


def prepare_padded_params(params, *, emb_dim, hidden_dim, pos_dim, num_layers):
    """Re-layout PyTorch-style LSTM params into kernel-friendly slabs.

    No hidden-dim padding: W_hh is the real (H, 4H); only the layer-input width
    is unified to D = max(E, H) and the fc output is lane-padded to 128.
    """
    E, H, P, L = emb_dim, hidden_dim, pos_dim, num_layers
    D = max(E, H)
    G = 4 * H
    Pp = max(_round_up(P, 128), 128)

    emb = params["emb"].astype(jnp.float32)
    emb_p = jnp.zeros((emb.shape[0], D), jnp.float32).at[:, :E].set(emb)

    def pack_w_ih(w_pt):                       # (4H, in_dim) torch -> (D, 4H)
        in_dim = w_pt.shape[1]
        out = jnp.zeros((D, G), jnp.float32)
        return out.at[:in_dim, :].set(w_pt.T.astype(jnp.float32))

    def pack_w_hh(w_pt):                       # (4H, H) torch -> (H, 4H)
        return w_pt.T.astype(jnp.float32)

    w_ih_p = jnp.stack([pack_w_ih(params[f"w_ih_{l}"]) for l in range(L)])   # (L,D,G)
    w_hh_p = jnp.stack([pack_w_hh(params[f"w_hh_{l}"]) for l in range(L)])   # (L,H,G)
    b_p = jnp.stack(
        [(params[f"b_ih_{l}"] + params[f"b_hh_{l}"]).astype(jnp.float32)[None, :]
         for l in range(L)])                                                 # (L,1,G)

    w_fc_p = jnp.zeros((D, Pp), jnp.float32).at[:H, :P].set(
        params["w_fc"].T.astype(jnp.float32))
    b_fc_p = jnp.zeros((1, Pp), jnp.float32).at[0, :P].set(
        params["b_fc"].astype(jnp.float32))
    return dict(emb=emb_p, w_ih=w_ih_p, w_hh=w_hh_p, b=b_p,
                w_fc=w_fc_p, b_fc=b_fc_p)


@functools.partial(jax.jit, static_argnames=("pos_dim",))
def lstm_forward(token_ids, h0, c0, emb_p, w_ih_p, w_hh_p, b_p, w_fc_p, b_fc_p,
                 *, pos_dim):
    """token_ids: (S,) int; h0/c0: (L, H); returns log-probs (S, pos_dim) f32."""
    S = token_ids.shape[0]
    S_pad = _round_up(max(S, 1), 8)
    L, D, G = w_ih_p.shape
    H = w_hh_p.shape[1]
    Pp = w_fc_p.shape[1]

    # Vectorized embedding gather in the wrapper (off the serial kernel path).
    tok = jnp.zeros((S_pad,), jnp.int32).at[:S].set(token_ids.astype(jnp.int32))
    x = emb_p[tok]                                          # (S_pad, D)

    h0_p = h0.astype(jnp.float32)[:, None, :]               # (L, 1, H)
    c0_p = c0.astype(jnp.float32)[:, None, :]

    kernel = functools.partial(_lstm_kernel, hidden_dim=H, valid_pos=pos_dim)

    flops = int(L * (2 * S_pad * D * G       # input->gates (batched)
                     + 2 * S_pad * H * G)    # recurrent matvecs
                + 2 * S_pad * D * Pp)        # fc
    transcendentals = int(L * S_pad * 8 * H + S_pad * Pp)
    bytes_accessed = int(4 * (x.size + w_ih_p.size + w_hh_p.size + b_p.size
                              + w_fc_p.size + b_fc_p.size + h0_p.size
                              + c0_p.size + S_pad * Pp))

    out = pl.pallas_call(
        kernel,
        out_shape=jax.ShapeDtypeStruct((S_pad, Pp), jnp.float32),
        grid_spec=pltpu.PrefetchScalarGridSpec(
            num_scalar_prefetch=0,
            grid=(L,),                                   # one grid step per layer
            in_specs=[
                pl.BlockSpec((S_pad, D), lambda l: (0, 0)),      # x (layer-0 input)
                pl.BlockSpec((1, D, G), lambda l: (l, 0, 0)),    # W_ih  per layer
                pl.BlockSpec((1, H, G), lambda l: (l, 0, 0)),    # W_hh  per layer
                pl.BlockSpec((1, 1, G), lambda l: (l, 0, 0)),    # bias  per layer
                pl.BlockSpec((D, Pp), lambda l: (0, 0)),         # W_fc
                pl.BlockSpec((1, Pp), lambda l: (0, 0)),         # b_fc
                pl.BlockSpec((1, 1, H), lambda l: (l, 0, 0)),    # h0    per layer
                pl.BlockSpec((1, 1, H), lambda l: (l, 0, 0)),    # c0    per layer
            ],
            out_specs=pl.BlockSpec((S_pad, Pp), lambda l: (0, 0)),
            scratch_shapes=[
                pltpu.VMEM((S_pad, D), jnp.float32),   # layer input / output
                pltpu.VMEM((S_pad, G), jnp.float32),   # gates projection
            ],
        ),
        compiler_params=pltpu.CompilerParams(
            dimension_semantics=("arbitrary",)),       # layers are sequential
        cost_estimate=pl.CostEstimate(flops=flops,
                                      transcendentals=transcendentals,
                                      bytes_accessed=bytes_accessed),
    )(x, w_ih_p, w_hh_p, b_p, w_fc_p, b_fc_p, h0_p, c0_p)

    return out[:S, :pos_dim]


def init_params(key, vocab_size, pos_size, num_layers, emb_dim, hidden_dim):
    """Deterministic synthetic params in PyTorch layout (not a checkpoint load)."""
    keys = jax.random.split(key, 4 * num_layers + 3)
    params = {"emb": jax.random.normal(keys[0], (vocab_size, emb_dim), jnp.float32)}
    lim = 1.0 / jnp.sqrt(jnp.float32(hidden_dim))
    k = 1
    for l in range(num_layers):
        in_dim = emb_dim if l == 0 else hidden_dim
        params[f"w_ih_{l}"] = jax.random.uniform(
            keys[k], (4 * hidden_dim, in_dim), jnp.float32, -lim, lim); k += 1
        params[f"w_hh_{l}"] = jax.random.uniform(
            keys[k], (4 * hidden_dim, hidden_dim), jnp.float32, -lim, lim); k += 1
        params[f"b_ih_{l}"] = jax.random.uniform(
            keys[k], (4 * hidden_dim,), jnp.float32, -lim, lim); k += 1
        params[f"b_hh_{l}"] = jax.random.uniform(
            keys[k], (4 * hidden_dim,), jnp.float32, -lim, lim); k += 1
    params["w_fc"] = jax.random.uniform(
        keys[k], (pos_size, hidden_dim), jnp.float32, -lim, lim); k += 1
    params["b_fc"] = jax.random.uniform(
        keys[k], (pos_size,), jnp.float32, -lim, lim)
    return params


def reference_forward(token_ids, h0, c0, params, *, num_layers, hidden_dim):
    """Pure-JAX reference matching torch.nn.LSTM semantics (unbatched)."""
    H = hidden_dim
    x = params["emb"][token_ids]                          # (S, E)
    S = x.shape[0]
    for l in range(num_layers):
        w_ih = params[f"w_ih_{l}"]                        # (4H, in_dim)
        w_hh = params[f"w_hh_{l}"]                        # (4H, H)
        b = params[f"b_ih_{l}"] + params[f"b_hh_{l}"]
        h_t, c_t = h0[l], c0[l]
        outs = []
        for t in range(S):
            gates = x[t] @ w_ih.T + h_t @ w_hh.T + b
            i_g = jax.nn.sigmoid(gates[0 * H:1 * H])
            f_g = jax.nn.sigmoid(gates[1 * H:2 * H])
            g_g = jnp.tanh(gates[2 * H:3 * H])
            o_g = jax.nn.sigmoid(gates[3 * H:4 * H])
            c_t = f_g * c_t + i_g * g_g
            h_t = o_g * jnp.tanh(c_t)
            outs.append(h_t)
        x = jnp.stack(outs)                               # (S, H)
    logits = x @ params["w_fc"].T + params["b_fc"]
    return jax.nn.log_softmax(logits, axis=1)


if __name__ == "__main__":
    vocab_size = 50
    pos_size = 10
    emb_dim = 16
    hidden_dim = 32
    num_layers = 2
    seq_len = 8

    key = jax.random.PRNGKey(0)
    k_params, k_ids = jax.random.split(key)
    params = init_params(k_params, vocab_size, pos_size, num_layers,
                         emb_dim, hidden_dim)
    token_ids = jax.random.randint(k_ids, (seq_len,), 0, vocab_size,
                                   dtype=jnp.int32)

    # init_hidden equivalent: zeros (num_layers, hidden_dim) for both h and c.
    h0 = jnp.zeros((num_layers, hidden_dim), jnp.float32)
    c0 = jnp.zeros((num_layers, hidden_dim), jnp.float32)

    padded = prepare_padded_params(params, emb_dim=emb_dim, hidden_dim=hidden_dim,
                                   pos_dim=pos_size, num_layers=num_layers)

    out = lstm_forward(token_ids, h0, c0,
                       padded["emb"], padded["w_ih"], padded["w_hh"], padded["b"],
                       padded["w_fc"], padded["b_fc"], pos_dim=pos_size)
    out = jax.block_until_ready(out)

    ref = reference_forward(token_ids, h0, c0, params,
                            num_layers=num_layers, hidden_dim=hidden_dim)
    assert out.shape == (seq_len, pos_size)
    # Slightly relaxed tolerance: sigmoid uses the EUP approximate reciprocal.
    assert jnp.allclose(out, ref, atol=5e-3, rtol=5e-3), "mismatch vs reference"

    print("KERNEL_OK")
</pallas_src>

<mosaic_0001>
module attributes {stable_mosaic.version = 11 : i64} {
  func.func @_lstm_kernel(%arg0: i32, %arg1: memref<8x32xf32, #tpu.memory_space<vmem>>, %arg2: memref<1x32x128xf32, #tpu.memory_space<vmem>>, %arg3: memref<1x32x128xf32, #tpu.memory_space<vmem>>, %arg4: memref<1x1x128xf32, #tpu.memory_space<vmem>>, %arg5: memref<32x128xf32, #tpu.memory_space<vmem>>, %arg6: memref<1x128xf32, #tpu.memory_space<vmem>>, %arg7: memref<1x1x32xf32, #tpu.memory_space<vmem>>, %arg8: memref<1x1x32xf32, #tpu.memory_space<vmem>>, %arg9: memref<8x128xf32, #tpu.memory_space<vmem>>, %arg10: memref<8x32xf32, #tpu.memory_space<vmem>>, %arg11: memref<8x128xf32, #tpu.memory_space<vmem>>) attributes {dimension_semantics = [#tpu.dimension_semantics<arbitrary>], iteration_bounds = array<i64: 2>, scalar_prefetch = 0 : i64, scratch_operands = 2 : i64, tpu.core_type = #tpu.core_type<tc>, window_params = [{pipeline_mode = #tpu.pipeline_mode<synchronous>, transform_indices = @transform_0, window_bounds = array<i64: 8, 32>}, {transform_indices = @transform_1, window_bounds = array<i64: 1, 32, 128>}, {transform_indices = @transform_2, window_bounds = array<i64: 1, 32, 128>}, {transform_indices = @transform_3, window_bounds = array<i64: 1, 1, 128>}, {pipeline_mode = #tpu.pipeline_mode<synchronous>, transform_indices = @transform_4, window_bounds = array<i64: 32, 128>}, {pipeline_mode = #tpu.pipeline_mode<synchronous>, transform_indices = @transform_5, window_bounds = array<i64: 1, 128>}, {transform_indices = @transform_6, window_bounds = array<i64: 1, 1, 32>}, {transform_indices = @transform_7, window_bounds = array<i64: 1, 1, 32>}, {pipeline_mode = #tpu.pipeline_mode<synchronous>, transform_indices = @transform_8, window_bounds = array<i64: 8, 128>}]} {
    %c0_i32 = arith.constant 0 : i32
    %0 = arith.cmpi eq, %arg0, %c0_i32 : i32
    %1 = arith.extui %0 : i1 to i32
    %c0_i32_0 = arith.constant 0 : i32
    %2 = arith.cmpi ne, %1, %c0_i32_0 : i32
    scf.if %2 {
      %c0_94 = arith.constant 0 : index
      %c0_95 = arith.constant 0 : index
      %293 = vector.load %arg1[%c0_94, %c0_95] : memref<8x32xf32, #tpu.memory_space<vmem>>, vector<8x32xf32>
      %c0_96 = arith.constant 0 : index
      %c0_97 = arith.constant 0 : index
      %294 = vector.load %arg10[%c0_96, %c0_97] : memref<8x32xf32, #tpu.memory_space<vmem>>, vector<8x32xf32>
      tpu.vector_store %arg10[%c0_96, %c0_97], %293 {strides = array<i32>} : memref<8x32xf32, #tpu.memory_space<vmem>>, vector<8x32xf32>,
    } else {
    }
    %c0 = arith.constant 0 : index
    %c0_1 = arith.constant 0 : index
    %3 = vector.load %arg10[%c0, %c0_1] : memref<8x32xf32, #tpu.memory_space<vmem>>, vector<8x32xf32>
    %c0_2 = arith.constant 0 : index
    %c0_3 = arith.constant 0 : index
    %c0_4 = arith.constant 0 : index
    %4 = vector.load %arg2[%c0_2, %c0_3, %c0_4] : memref<1x32x128xf32, #tpu.memory_space<vmem>>, vector<1x32x128xf32>
    %5 = vector.shape_cast %4 : vector<1x32x128xf32> to vector<32x128xf32>
    %cst = arith.constant dense<0.000000e+00> : vector<8x128xf32>
    %6 = tpu.matmul %3, %5, %cst {dimension_numbers = #tpu.dot_dimension_numbers<[1], [0], [0], [1], [0, 0, 1, 1], [], []>} : vector<8x32xf32>, vector<32x128xf32>, vector<8x128xf32> -> vector<8x128xf32>
    %c0_5 = arith.constant 0 : index
    %c0_6 = arith.constant 0 : index
    %c0_7 = arith.constant 0 : index
    %7 = vector.load %arg4[%c0_5, %c0_6, %c0_7] : memref<1x1x128xf32, #tpu.memory_space<vmem>>, vector<1x1x128xf32>
    %8 = vector.shape_cast %7 : vector<1x1x128xf32> to vector<1x128xf32>
    %9 = vector.broadcast %8 : vector<1x128xf32> to vector<8x128xf32>
    %10 = arith.addf %6, %9 : vector<8x128xf32>
    %c0_8 = arith.constant 0 : index
    %c0_9 = arith.constant 0 : index
    %11 = vector.load %arg11[%c0_8, %c0_9] : memref<8x128xf32, #tpu.memory_space<vmem>>, vector<8x128xf32>
    tpu.vector_store %arg11[%c0_8, %c0_9], %10 {strides = array<i32>} : memref<8x128xf32, #tpu.memory_space<vmem>>, vector<8x128xf32>,
    %c0_10 = arith.constant 0 : index
    %c0_11 = arith.constant 0 : index
    %c0_12 = arith.constant 0 : index
    %12 = vector.load %arg3[%c0_10, %c0_11, %c0_12] : memref<1x32x128xf32, #tpu.memory_space<vmem>>, vector<1x32x128xf32>
    %13 = vector.shape_cast %12 : vector<1x32x128xf32> to vector<32x128xf32>
    %c0_13 = arith.constant 0 : index
    %c0_14 = arith.constant 0 : index
    %c0_15 = arith.constant 0 : index
    %14 = vector.load %arg7[%c0_13, %c0_14, %c0_15] : memref<1x1x32xf32, #tpu.memory_space<vmem>>, vector<1x1x32xf32>
    %15 = vector.shape_cast %14 : vector<1x1x32xf32> to vector<1x32xf32>
    %c0_16 = arith.constant 0 : index
    %c0_17 = arith.constant 0 : index
    %c0_18 = arith.constant 0 : index
    %16 = vector.load %arg8[%c0_16, %c0_17, %c0_18] : memref<1x1x32xf32, #tpu.memory_space<vmem>>, vector<1x1x32xf32>
    %17 = vector.shape_cast %16 : vector<1x1x32xf32> to vector<1x32xf32>
    %c0_i32_19 = arith.constant 0 : i32
    %18 = arith.index_cast %c0_i32_19 : i32 to index
    %c0_20 = arith.constant 0 : index
    %19 = vector.load %arg11[%18, %c0_20] : memref<8x128xf32, #tpu.memory_space<vmem>>, vector<1x128xf32>
    %cst_21 = arith.constant dense<0.000000e+00> : vector<1x128xf32>
    %20 = tpu.matmul %15, %13, %cst_21 {dimension_numbers = #tpu.dot_dimension_numbers<[1], [0], [0], [1], [0, 0, 1, 1], [], []>} : vector<1x32xf32>, vector<32x128xf32>, vector<1x128xf32> -> vector<1x128xf32>
    %21 = arith.addf %19, %20 : vector<1x128xf32>
    %22 = vector.extract_strided_slice %21 {offsets = [0, 0], sizes = [1, 32], strides = [1, 1]} : vector<1x128xf32> to vector<1x32xf32>
    %cst_22 = arith.constant 0.000000e+00 : f32
    %23 = vector.broadcast %cst_22 : f32 to vector<1x32xf32>
    %24 = arith.subf %23, %22 : vector<1x32xf32>
    %25 = math.exp %24 : vector<1x32xf32>
    %cst_23 = arith.constant 1.000000e+00 : f32
    %26 = vector.broadcast %cst_23 : f32 to vector<1x32xf32>
    %27 = arith.addf %26, %25 : vector<1x32xf32>
    %28 = tpu.reciprocal %27 {approx = true} : vector<1x32xf32> -> vector<1x32xf32>
    %29 = vector.extract_strided_slice %21 {offsets = [0, 32], sizes = [1, 32], strides = [1, 1]} : vector<1x128xf32> to vector<1x32xf32>
    %cst_24 = arith.constant 0.000000e+00 : f32
    %30 = vector.broadcast %cst_24 : f32 to vector<1x32xf32>
    %31 = arith.subf %30, %29 : vector<1x32xf32>
    %32 = math.exp %31 : vector<1x32xf32>
    %cst_25 = arith.constant 1.000000e+00 : f32
    %33 = vector.broadcast %cst_25 : f32 to vector<1x32xf32>
    %34 = arith.addf %33, %32 : vector<1x32xf32>
    %35 = tpu.reciprocal %34 {approx = true} : vector<1x32xf32> -> vector<1x32xf32>
    %36 = vector.extract_strided_slice %21 {offsets = [0, 64], sizes = [1, 32], strides = [1, 1]} : vector<1x128xf32> to vector<1x32xf32>
    %37 = math.tanh %36 : vector<1x32xf32>
    %38 = vector.extract_strided_slice %21 {offsets = [0, 96], sizes = [1, 32], strides = [1, 1]} : vector<1x128xf32> to vector<1x32xf32>
    %cst_26 = arith.constant 0.000000e+00 : f32
    %39 = vector.broadcast %cst_26 : f32 to vector<1x32xf32>
    %40 = arith.subf %39, %38 : vector<1x32xf32>
    %41 = math.exp %40 : vector<1x32xf32>
    %cst_27 = arith.constant 1.000000e+00 : f32
    %42 = vector.broadcast %cst_27 : f32 to vector<1x32xf32>
    %43 = arith.addf %42, %41 : vector<1x32xf32>
    %44 = tpu.reciprocal %43 {approx = true} : vector<1x32xf32> -> vector<1x32xf32>
    %45 = arith.mulf %35, %17 : vector<1x32xf32>
    %46 = arith.mulf %28, %37 : vector<1x32xf32>
    %47 = arith.addf %45, %46 : vector<1x32xf32>
    %48 = math.tanh %47 : vector<1x32xf32>
    %49 = arith.mulf %44, %48 : vector<1x32xf32>
    %50 = arith.index_cast %c0_i32_19 : i32 to index
    %c0_28 = arith.constant 0 : index
    %51 = vector.load %arg10[%50, %c0_28] : memref<8x32xf32, #tpu.memory_space<vmem>>, vector<1x32xf32>
    tpu.vector_store %arg10[%50, %c0_28], %49 {strides = array<i32>} : memref<8x32xf32, #tpu.memory_space<vmem>>, vector<1x32xf32>,
    %c1_i32 = arith.constant 1 : i32
    %52 = arith.index_cast %c1_i32 : i32 to index
    %c0_29 = arith.constant 0 : index
    %53 = vector.load %arg11[%52, %c0_29] : memref<8x128xf32, #tpu.memory_space<vmem>>, vector<1x128xf32>
    %cst_30 = arith.constant dense<0.000000e+00> : vector<1x128xf32>
    %54 = tpu.matmul %49, %13, %cst_30 {dimension_numbers = #tpu.dot_dimension_numbers<[1], [0], [0], [1], [0, 0, 1, 1], [], []>} : vector<1x32xf32>, vector<32x128xf32>, vector<1x128xf32> -> vector<1x128xf32>
    %55 = arith.addf %53, %54 : vector<1x128xf32>
    %56 = vector.extract_strided_slice %55 {offsets = [0, 0], sizes = [1, 32], strides = [1, 1]} : vector<1x128xf32> to vector<1x32xf32>
    %cst_31 = arith.constant 0.000000e+00 : f32
    %57 = vector.broadcast %cst_31 : f32 to vector<1x32xf32>
    %58 = arith.subf %57, %56 : vector<1x32xf32>
    %59 = math.exp %58 : vector<1x32xf32>
    %cst_32 = arith.constant 1.000000e+00 : f32
    %60 = vector.broadcast %cst_32 : f32 to vector<1x32xf32>
    %61 = arith.addf %60, %59 : vector<1x32xf32>
    %62 = tpu.reciprocal %61 {approx = true} : vector<1x32xf32> -> vector<1x32xf32>
    %63 = vector.extract_strided_slice %55 {offsets = [0, 32], sizes = [1, 32], strides = [1, 1]} : vector<1x128xf32> to vector<1x32xf32>
    %cst_33 = arith.constant 0.000000e+00 : f32
    %64 = vector.broadcast %cst_33 : f32 to vector<1x32xf32>
    %65 = arith.subf %64, %63 : vector<1x32xf32>
    %66 = math.exp %65 : vector<1x32xf32>
    %cst_34 = arith.constant 1.000000e+00 : f32
    %67 = vector.broadcast %cst_34 : f32 to vector<1x32xf32>
    %68 = arith.addf %67, %66 : vector<1x32xf32>
    %69 = tpu.reciprocal %68 {approx = true} : vector<1x32xf32> -> vector<1x32xf32>
    %70 = vector.extract_strided_slice %55 {offsets = [0, 64], sizes = [1, 32], strides = [1, 1]} : vector<1x128xf32> to vector<1x32xf32>
    %71 = math.tanh %70 : vector<1x32xf32>
    %72 = vector.extract_strided_slice %55 {offsets = [0, 96], sizes = [1, 32], strides = [1, 1]} : vector<1x128xf32> to vector<1x32xf32>
    %cst_35 = arith.constant 0.000000e+00 : f32
    %73 = vector.broadcast %cst_35 : f32 to vector<1x32xf32>
    %74 = arith.subf %73, %72 : vector<1x32xf32>
    %75 = math.exp %74 : vector<1x32xf32>
    %cst_36 = arith.constant 1.000000e+00 : f32
    %76 = vector.broadcast %cst_36 : f32 to vector<1x32xf32>
    %77 = arith.addf %76, %75 : vector<1x32xf32>
    %78 = tpu.reciprocal %77 {approx = true} : vector<1x32xf32> -> vector<1x32xf32>
    %79 = arith.mulf %69, %47 : vector<1x32xf32>
    %80 = arith.mulf %62, %71 : vector<1x32xf32>
    %81 = arith.addf %79, %80 : vector<1x32xf32>
    %82 = math.tanh %81 : vector<1x32xf32>
    %83 = arith.mulf %78, %82 : vector<1x32xf32>
    %84 = arith.index_cast %c1_i32 : i32 to index
    %c0_37 = arith.constant 0 : index
    %85 = vector.load %arg10[%84, %c0_37] : memref<8x32xf32, #tpu.memory_space<vmem>>, vector<1x32xf32>
    tpu.vector_store %arg10[%84, %c0_37], %83 {strides = array<i32>} : memref<8x32xf32, #tpu.memory_space<vmem>>, vector<1x32xf32>,
    %c2_i32 = arith.constant 2 : i32
    %86 = arith.index_cast %c2_i32 : i32 to index
    %c0_38 = arith.constant 0 : index
    %87 = vector.load %arg11[%86, %c0_38] : memref<8x128xf32, #tpu.memory_space<vmem>>, vector<1x128xf32>
    %cst_39 = arith.constant dense<0.000000e+00> : vector<1x128xf32>
    %88 = tpu.matmul %83, %13, %cst_39 {dimension_numbers = #tpu.dot_dimension_numbers<[1], [0], [0], [1], [0, 0, 1, 1], [], []>} : vector<1x32xf32>, vector<32x128xf32>, vector<1x128xf32> -> vector<1x128xf32>
    %89 = arith.addf %87, %88 : vector<1x128xf32>
    %90 = vector.extract_strided_slice %89 {offsets = [0, 0], sizes = [1, 32], strides = [1, 1]} : vector<1x128xf32> to vector<1x32xf32>
    %cst_40 = arith.constant 0.000000e+00 : f32
    %91 = vector.broadcast %cst_40 : f32 to vector<1x32xf32>
    %92 = arith.subf %91, %90 : vector<1x32xf32>
    %93 = math.exp %92 : vector<1x32xf32>
    %cst_41 = arith.constant 1.000000e+00 : f32
    %94 = vector.broadcast %cst_41 : f32 to vector<1x32xf32>
    %95 = arith.addf %94, %93 : vector<1x32xf32>
    %96 = tpu.reciprocal %95 {approx = true} : vector<1x32xf32> -> vector<1x32xf32>
    %97 = vector.extract_strided_slice %89 {offsets = [0, 32], sizes = [1, 32], strides = [1, 1]} : vector<1x128xf32> to vector<1x32xf32>
    %cst_42 = arith.constant 0.000000e+00 : f32
    %98 = vector.broadcast %cst_42 : f32 to vector<1x32xf32>
    %99 = arith.subf %98, %97 : vector<1x32xf32>
    %100 = math.exp %99 : vector<1x32xf32>
    %cst_43 = arith.constant 1.000000e+00 : f32
    %101 = vector.broadcast %cst_43 : f32 to vector<1x32xf32>
    %102 = arith.addf %101, %100 : vector<1x32xf32>
    %103 = tpu.reciprocal %102 {approx = true} : vector<1x32xf32> -> vector<1x32xf32>
    %104 = vector.extract_strided_slice %89 {offsets = [0, 64], sizes = [1, 32], strides = [1, 1]} : vector<1x128xf32> to vector<1x32xf32>
    %105 = math.tanh %104 : vector<1x32xf32>
    %106 = vector.extract_strided_slice %89 {offsets = [0, 96], sizes = [1, 32], strides = [1, 1]} : vector<1x128xf32> to vector<1x32xf32>
    %cst_44 = arith.constant 0.000000e+00 : f32
    %107 = vector.broadcast %cst_44 : f32 to vector<1x32xf32>
    %108 = arith.subf %107, %106 : vector<1x32xf32>
    %109 = math.exp %108 : vector<1x32xf32>
    %cst_45 = arith.constant 1.000000e+00 : f32
    %110 = vector.broadcast %cst_45 : f32 to vector<1x32xf32>
    %111 = arith.addf %110, %109 : vector<1x32xf32>
    %112 = tpu.reciprocal %111 {approx = true} : vector<1x32xf32> -> vector<1x32xf32>
    %113 = arith.mulf %103, %81 : vector<1x32xf32>
    %114 = arith.mulf %96, %105 : vector<1x32xf32>
    %115 = arith.addf %113, %114 : vector<1x32xf32>
    %116 = math.tanh %115 : vector<1x32xf32>
    %117 = arith.mulf %112, %116 : vector<1x32xf32>
    %118 = arith.index_cast %c2_i32 : i32 to index
    %c0_46 = arith.constant 0 : index
    %119 = vector.load %arg10[%118, %c0_46] : memref<8x32xf32, #tpu.memory_space<vmem>>, vector<1x32xf32>
    tpu.vector_store %arg10[%118, %c0_46], %117 {strides = array<i32>} : memref<8x32xf32, #tpu.memory_space<vmem>>, vector<1x32xf32>,
    %c3_i32 = arith.constant 3 : i32
    %120 = arith.index_cast %c3_i32 : i32 to index
    %c0_47 = arith.constant 0 : index
    %121 = vector.load %arg11[%120, %c0_47] : memref<8x128xf32, #tpu.memory_space<vmem>>, vector<1x128xf32>
    %cst_48 = arith.constant dense<0.000000e+00> : vector<1x128xf32>
    %122 = tpu.matmul %117, %13, %cst_48 {dimension_numbers = #tpu.dot_dimension_numbers<[1], [0], [0], [1], [0, 0, 1, 1], [], []>} : vector<1x32xf32>, vector<32x128xf32>, vector<1x128xf32> -> vector<1x128xf32>
    %123 = arith.addf %121, %122 : vector<1x128xf32>
    %124 = vector.extract_strided_slice %123 {offsets = [0, 0], sizes = [1, 32], strides = [1, 1]} : vector<1x128xf32> to vector<1x32xf32>
    %cst_49 = arith.constant 0.000000e+00 : f32
    %125 = vector.broadcast %cst_49 : f32 to vector<1x32xf32>
    %126 = arith.subf %125, %124 : vector<1x32xf32>
    %127 = math.exp %126 : vector<1x32xf32>
    %cst_50 = arith.constant 1.000000e+00 : f32
    %128 = vector.broadcast %cst_50 : f32 to vector<1x32xf32>
    %129 = arith.addf %128, %127 : vector<1x32xf32>
    %130 = tpu.reciprocal %129 {approx = true} : vector<1x32xf32> -> vector<1x32xf32>
    %131 = vector.extract_strided_slice %123 {offsets = [0, 32], sizes = [1, 32], strides = [1, 1]} : vector<1x128xf32> to vector<1x32xf32>
    %cst_51 = arith.constant 0.000000e+00 : f32
    %132 = vector.broadcast %cst_51 : f32 to vector<1x32xf32>
    %133 = arith.subf %132, %131 : vector<1x32xf32>
    %134 = math.exp %133 : vector<1x32xf32>
    %cst_52 = arith.constant 1.000000e+00 : f32
    %135 = vector.broadcast %cst_52 : f32 to vector<1x32xf32>
    %136 = arith.addf %135, %134 : vector<1x32xf32>
    %137 = tpu.reciprocal %136 {approx = true} : vector<1x32xf32> -> vector<1x32xf32>
    %138 = vector.extract_strided_slice %123 {offsets = [0, 64], sizes = [1, 32], strides = [1, 1]} : vector<1x128xf32> to vector<1x32xf32>
    %139 = math.tanh %138 : vector<1x32xf32>
    %140 = vector.extract_strided_slice %123 {offsets = [0, 96], sizes = [1, 32], strides = [1, 1]} : vector<1x128xf32> to vector<1x32xf32>
    %cst_53 = arith.constant 0.000000e+00 : f32
    %141 = vector.broadcast %cst_53 : f32 to vector<1x32xf32>
    %142 = arith.subf %141, %140 : vector<1x32xf32>
    %143 = math.exp %142 : vector<1x32xf32>
    %cst_54 = arith.constant 1.000000e+00 : f32
    %144 = vector.broadcast %cst_54 : f32 to vector<1x32xf32>
    %145 = arith.addf %144, %143 : vector<1x32xf32>
    %146 = tpu.reciprocal %145 {approx = true} : vector<1x32xf32> -> vector<1x32xf32>
    %147 = arith.mulf %137, %115 : vector<1x32xf32>
    %148 = arith.mulf %130, %139 : vector<1x32xf32>
    %149 = arith.addf %147, %148 : vector<1x32xf32>
    %150 = math.tanh %149 : vector<1x32xf32>
    %151 = arith.mulf %146, %150 : vector<1x32xf32>
    %152 = arith.index_cast %c3_i32 : i32 to index
    %c0_55 = arith.constant 0 : index
    %153 = vector.load %arg10[%152, %c0_55] : memref<8x32xf32, #tpu.memory_space<vmem>>, vector<1x32xf32>
    tpu.vector_store %arg10[%152, %c0_55], %151 {strides = array<i32>} : memref<8x32xf32, #tpu.memory_space<vmem>>, vector<1x32xf32>,
    %c4_i32 = arith.constant 4 : i32
    %154 = arith.index_cast %c4_i32 : i32 to index
    %c0_56 = arith.constant 0 : index
    %155 = vector.load %arg11[%154, %c0_56] : memref<8x128xf32, #tpu.memory_space<vmem>>, vector<1x128xf32>
    %cst_57 = arith.constant dense<0.000000e+00> : vector<1x128xf32>
    %156 = tpu.matmul %151, %13, %cst_57 {dimension_numbers = #tpu.dot_dimension_numbers<[1], [0], [0], [1], [0, 0, 1, 1], [], []>} : vector<1x32xf32>, vector<32x128xf32>, vector<1x128xf32> -> vector<1x128xf32>
    %157 = arith.addf %155, %156 : vector<1x128xf32>
    %158 = vector.extract_strided_slice %157 {offsets = [0, 0], sizes = [1, 32], strides = [1, 1]} : vector<1x128xf32> to vector<1x32xf32>
    %cst_58 = arith.constant 0.000000e+00 : f32
    %159 = vector.broadcast %cst_58 : f32 to vector<1x32xf32>
    %160 = arith.subf %159, %158 : vector<1x32xf32>
    %161 = math.exp %160 : vector<1x32xf32>
    %cst_59 = arith.constant 1.000000e+00 : f32
    %162 = vector.broadcast %cst_59 : f32 to vector<1x32xf32>
    %163 = arith.addf %162, %161 : vector<1x32xf32>
    %164 = tpu.reciprocal %163 {approx = true} : vector<1x32xf32> -> vector<1x32xf32>
    %165 = vector.extract_strided_slice %157 {offsets = [0, 32], sizes = [1, 32], strides = [1, 1]} : vector<1x128xf32> to vector<1x32xf32>
    %cst_60 = arith.constant 0.000000e+00 : f32
    %166 = vector.broadcast %cst_60 : f32 to vector<1x32xf32>
    %167 = arith.subf %166, %165 : vector<1x32xf32>
    %168 = math.exp %167 : vector<1x32xf32>
    %cst_61 = arith.constant 1.000000e+00 : f32
    %169 = vector.broadcast %cst_61 : f32 to vector<1x32xf32>
    %170 = arith.addf %169, %168 : vector<1x32xf32>
    %171 = tpu.reciprocal %170 {approx = true} : vector<1x32xf32> -> vector<1x32xf32>
    %172 = vector.extract_strided_slice %157 {offsets = [0, 64], sizes = [1, 32], strides = [1, 1]} : vector<1x128xf32> to vector<1x32xf32>
    %173 = math.tanh %172 : vector<1x32xf32>
    %174 = vector.extract_strided_slice %157 {offsets = [0, 96], sizes = [1, 32], strides = [1, 1]} : vector<1x128xf32> to vector<1x32xf32>
    %cst_62 = arith.constant 0.000000e+00 : f32
    %175 = vector.broadcast %cst_62 : f32 to vector<1x32xf32>
    %176 = arith.subf %175, %174 : vector<1x32xf32>
    %177 = math.exp %176 : vector<1x32xf32>
    %cst_63 = arith.constant 1.000000e+00 : f32
    %178 = vector.broadcast %cst_63 : f32 to vector<1x32xf32>
    %179 = arith.addf %178, %177 : vector<1x32xf32>
    %180 = tpu.reciprocal %179 {approx = true} : vector<1x32xf32> -> vector<1x32xf32>
    %181 = arith.mulf %171, %149 : vector<1x32xf32>
    %182 = arith.mulf %164, %173 : vector<1x32xf32>
    %183 = arith.addf %181, %182 : vector<1x32xf32>
    %184 = math.tanh %183 : vector<1x32xf32>
    %185 = arith.mulf %180, %184 : vector<1x32xf32>
    %186 = arith.index_cast %c4_i32 : i32 to index
    %c0_64 = arith.constant 0 : index
    %187 = vector.load %arg10[%186, %c0_64] : memref<8x32xf32, #tpu.memory_space<vmem>>, vector<1x32xf32>
    tpu.vector_store %arg10[%186, %c0_64], %185 {strides = array<i32>} : memref<8x32xf32, #tpu.memory_space<vmem>>, vector<1x32xf32>,
    %c5_i32 = arith.constant 5 : i32
    %188 = arith.index_cast %c5_i32 : i32 to index
    %c0_65 = arith.constant 0 : index
    %189 = vector.load %arg11[%188, %c0_65] : memref<8x128xf32, #tpu.memory_space<vmem>>, vector<1x128xf32>
    %cst_66 = arith.constant dense<0.000000e+00> : vector<1x128xf32>
    %190 = tpu.matmul %185, %13, %cst_66 {dimension_numbers = #tpu.dot_dimension_numbers<[1], [0], [0], [1], [0, 0, 1, 1], [], []>} : vector<1x32xf32>, vector<32x128xf32>, vector<1x128xf32> -> vector<1x128xf32>
    %191 = arith.addf %189, %190 : vector<1x128xf32>
    %192 = vector.extract_strided_slice %191 {offsets = [0, 0], sizes = [1, 32], strides = [1, 1]} : vector<1x128xf32> to vector<1x32xf32>
    %cst_67 = arith.constant 0.000000e+00 : f32
    %193 = vector.broadcast %cst_67 : f32 to vector<1x32xf32>
    %194 = arith.subf %193, %192 : vector<1x32xf32>
    %195 = math.exp %194 : vector<1x32xf32>
    %cst_68 = arith.constant 1.000000e+00 : f32
    %196 = vector.broadcast %cst_68 : f32 to vector<1x32xf32>
    %197 = arith.addf %196, %195 : vector<1x32xf32>
    %198 = tpu.reciprocal %197 {approx = true} : vector<1x32xf32> -> vector<1x32xf32>
    %199 = vector.extract_strided_slice %191 {offsets = [0, 32], sizes = [1, 32], strides = [1, 1]} : vector<1x128xf32> to vector<1x32xf32>
    %cst_69 = arith.constant 0.000000e+00 : f32
    %200 = vector.broadcast %cst_69 : f32 to vector<1x32xf32>
    %201 = arith.subf %200, %199 : vector<1x32xf32>
    %202 = math.exp %201 : vector<1x32xf32>
    %cst_70 = arith.constant 1.000000e+00 : f32
    %203 = vector.broadcast %cst_70 : f32 to vector<1x32xf32>
    %204 = arith.addf %203, %202 : vector<1x32xf32>
    %205 = tpu.reciprocal %204 {approx = true} : vector<1x32xf32> -> vector<1x32xf32>
    %206 = vector.extract_strided_slice %191 {offsets = [0, 64], sizes = [1, 32], strides = [1, 1]} : vector<1x128xf32> to vector<1x32xf32>
    %207 = math.tanh %206 : vector<1x32xf32>
    %208 = vector.extract_strided_slice %191 {offsets = [0, 96], sizes = [1, 32], strides = [1, 1]} : vector<1x128xf32> to vector<1x32xf32>
    %cst_71 = arith.constant 0.000000e+00 : f32
    %209 = vector.broadcast %cst_71 : f32 to vector<1x32xf32>
    %210 = arith.subf %209, %208 : vector<1x32xf32>
    %211 = math.exp %210 : vector<1x32xf32>
    %cst_72 = arith.constant 1.000000e+00 : f32
    %212 = vector.broadcast %cst_72 : f32 to vector<1x32xf32>
    %213 = arith.addf %212, %211 : vector<1x32xf32>
    %214 = tpu.reciprocal %213 {approx = true} : vector<1x32xf32> -> vector<1x32xf32>
    %215 = arith.mulf %205, %183 : vector<1x32xf32>
    %216 = arith.mulf %198, %207 : vector<1x32xf32>
    %217 = arith.addf %215, %216 : vector<1x32xf32>
    %218 = math.tanh %217 : vector<1x32xf32>
    %219 = arith.mulf %214, %218 : vector<1x32xf32>
    %220 = arith.index_cast %c5_i32 : i32 to index
    %c0_73 = arith.constant 0 : index
    %221 = vector.load %arg10[%220, %c0_73] : memref<8x32xf32, #tpu.memory_space<vmem>>, vector<1x32xf32>
    tpu.vector_store %arg10[%220, %c0_73], %219 {strides = array<i32>} : memref<8x32xf32, #tpu.memory_space<vmem>>, vector<1x32xf32>,
    %c6_i32 = arith.constant 6 : i32
    %222 = arith.index_cast %c6_i32 : i32 to index
    %c0_74 = arith.constant 0 : index
    %223 = vector.load %arg11[%222, %c0_74] : memref<8x128xf32, #tpu.memory_space<vmem>>, vector<1x128xf32>
    %cst_75 = arith.constant dense<0.000000e+00> : vector<1x128xf32>
    %224 = tpu.matmul %219, %13, %cst_75 {dimension_numbers = #tpu.dot_dimension_numbers<[1], [0], [0], [1], [0, 0, 1, 1], [], []>} : vector<1x32xf32>, vector<32x128xf32>, vector<1x128xf32> -> vector<1x128xf32>
    %225 = arith.addf %223, %224 : vector<1x128xf32>
    %226 = vector.extract_strided_slice %225 {offsets = [0, 0], sizes = [1, 32], strides = [1, 1]} : vector<1x128xf32> to vector<1x32xf32>
    %cst_76 = arith.constant 0.000000e+00 : f32
    %227 = vector.broadcast %cst_76 : f32 to vector<1x32xf32>
    %228 = arith.subf %227, %226 : vector<1x32xf32>
    %229 = math.exp %228 : vector<1x32xf32>
    %cst_77 = arith.constant 1.000000e+00 : f32
    %230 = vector.broadcast %cst_77 : f32 to vector<1x32xf32>
    %231 = arith.addf %230, %229 : vector<1x32xf32>
    %232 = tpu.reciprocal %231 {approx = true} : vector<1x32xf32> -> vector<1x32xf32>
    %233 = vector.extract_strided_slice %225 {offsets = [0, 32], sizes = [1, 32], strides = [1, 1]} : vector<1x128xf32> to vector<1x32xf32>
    %cst_78 = arith.constant 0.000000e+00 : f32
    %234 = vector.broadcast %cst_78 : f32 to vector<1x32xf32>
    %235 = arith.subf %234, %233 : vector<1x32xf32>
    %236 = math.exp %235 : vector<1x32xf32>
    %cst_79 = arith.constant 1.000000e+00 : f32
    %237 = vector.broadcast %cst_79 : f32 to vector<1x32xf32>
    %238 = arith.addf %237, %236 : vector<1x32xf32>
    %239 = tpu.reciprocal %238 {approx = true} : vector<1x32xf32> -> vector<1x32xf32>
    %240 = vector.extract_strided_slice %225 {offsets = [0, 64], sizes = [1, 32], strides = [1, 1]} : vector<1x128xf32> to vector<1x32xf32>
    %241 = math.tanh %240 : vector<1x32xf32>
    %242 = vector.extract_strided_slice %225 {offsets = [0, 96], sizes = [1, 32], strides = [1, 1]} : vector<1x128xf32> to vector<1x32xf32>
    %cst_80 = arith.constant 0.000000e+00 : f32
    %243 = vector.broadcast %cst_80 : f32 to vector<1x32xf32>
    %244 = arith.subf %243, %242 : vector<1x32xf32>
    %245 = math.exp %244 : vector<1x32xf32>
    %cst_81 = arith.constant 1.000000e+00 : f32
    %246 = vector.broadcast %cst_81 : f32 to vector<1x32xf32>
    %247 = arith.addf %246, %245 : vector<1x32xf32>
    %248 = tpu.reciprocal %247 {approx = true} : vector<1x32xf32> -> vector<1x32xf32>
    %249 = arith.mulf %239, %217 : vector<1x32xf32>
    %250 = arith.mulf %232, %241 : vector<1x32xf32>
    %251 = arith.addf %249, %250 : vector<1x32xf32>
    %252 = math.tanh %251 : vector<1x32xf32>
    %253 = arith.mulf %248, %252 : vector<1x32xf32>
    %254 = arith.index_cast %c6_i32 : i32 to index
    %c0_82 = arith.constant 0 : index
    %255 = vector.load %arg10[%254, %c0_82] : memref<8x32xf32, #tpu.memory_space<vmem>>, vector<1x32xf32>
    tpu.vector_store %arg10[%254, %c0_82], %253 {strides = array<i32>} : memref<8x32xf32, #tpu.memory_space<vmem>>, vector<1x32xf32>,
    %c7_i32 = arith.constant 7 : i32
    %256 = arith.index_cast %c7_i32 : i32 to index
    %c0_83 = arith.constant 0 : index
    %257 = vector.load %arg11[%256, %c0_83] : memref<8x128xf32, #tpu.memory_space<vmem>>, vector<1x128xf32>
    %cst_84 = arith.constant dense<0.000000e+00> : vector<1x128xf32>
    %258 = tpu.matmul %253, %13, %cst_84 {dimension_numbers = #tpu.dot_dimension_numbers<[1], [0], [0], [1], [0, 0, 1, 1], [], []>} : vector<1x32xf32>, vector<32x128xf32>, vector<1x128xf32> -> vector<1x128xf32>
    %259 = arith.addf %257, %258 : vector<1x128xf32>
    %260 = vector.extract_strided_slice %259 {offsets = [0, 0], sizes = [1, 32], strides = [1, 1]} : vector<1x128xf32> to vector<1x32xf32>
    %cst_85 = arith.constant 0.000000e+00 : f32
    %261 = vector.broadcast %cst_85 : f32 to vector<1x32xf32>
    %262 = arith.subf %261, %260 : vector<1x32xf32>
    %263 = math.exp %262 : vector<1x32xf32>
    %cst_86 = arith.constant 1.000000e+00 : f32
    %264 = vector.broadcast %cst_86 : f32 to vector<1x32xf32>
    %265 = arith.addf %264, %263 : vector<1x32xf32>
    %266 = tpu.reciprocal %265 {approx = true} : vector<1x32xf32> -> vector<1x32xf32>
    %267 = vector.extract_strided_slice %259 {offsets = [0, 32], sizes = [1, 32], strides = [1, 1]} : vector<1x128xf32> to vector<1x32xf32>
    %cst_87 = arith.constant 0.000000e+00 : f32
    %268 = vector.broadcast %cst_87 : f32 to vector<1x32xf32>
    %269 = arith.subf %268, %267 : vector<1x32xf32>
    %270 = math.exp %269 : vector<1x32xf32>
    %cst_88 = arith.constant 1.000000e+00 : f32
    %271 = vector.broadcast %cst_88 : f32 to vector<1x32xf32>
    %272 = arith.addf %271, %270 : vector<1x32xf32>
    %273 = tpu.reciprocal %272 {approx = true} : vector<1x32xf32> -> vector<1x32xf32>
    %274 = vector.extract_strided_slice %259 {offsets = [0, 64], sizes = [1, 32], strides = [1, 1]} : vector<1x128xf32> to vector<1x32xf32>
    %275 = math.tanh %274 : vector<1x32xf32>
    %276 = vector.extract_strided_slice %259 {offsets = [0, 96], sizes = [1, 32], strides = [1, 1]} : vector<1x128xf32> to vector<1x32xf32>
    %cst_89 = arith.constant 0.000000e+00 : f32
    %277 = vector.broadcast %cst_89 : f32 to vector<1x32xf32>
    %278 = arith.subf %277, %276 : vector<1x32xf32>
    %279 = math.exp %278 : vector<1x32xf32>
    %cst_90 = arith.constant 1.000000e+00 : f32
    %280 = vector.broadcast %cst_90 : f32 to vector<1x32xf32>
    %281 = arith.addf %280, %279 : vector<1x32xf32>
    %282 = tpu.reciprocal %281 {approx = true} : vector<1x32xf32> -> vector<1x32xf32>
    %283 = arith.mulf %273, %251 : vector<1x32xf32>
    %284 = arith.mulf %266, %275 : vector<1x32xf32>
    %285 = arith.addf %283, %284 : vector<1x32xf32>
    %286 = math.tanh %285 : vector<1x32xf32>
    %287 = arith.mulf %282, %286 : vector<1x32xf32>
    %288 = arith.index_cast %c7_i32 : i32 to index
    %c0_91 = arith.constant 0 : index
    %289 = vector.load %arg10[%288, %c0_91] : memref<8x32xf32, #tpu.memory_space<vmem>>, vector<1x32xf32>
    tpu.vector_store %arg10[%288, %c0_91], %287 {strides = array<i32>} : memref<8x32xf32, #tpu.memory_space<vmem>>, vector<1x32xf32>,
    %c8_i32 = arith.constant 8 : i32
    %c1_i32_92 = arith.constant 1 : i32
    %290 = arith.cmpi eq, %arg0, %c1_i32_92 : i32
    %291 = arith.extui %290 : i1 to i32
    %c0_i32_93 = arith.constant 0 : i32
    %292 = arith.cmpi ne, %291, %c0_i32_93 : i32
    scf.if %292 {
      %c0_94 = arith.constant 0 : index
      %c0_95 = arith.constant 0 : index
      %293 = vector.load %arg10[%c0_94, %c0_95] : memref<8x32xf32, #tpu.memory_space<vmem>>, vector<8x32xf32>
      %c0_96 = arith.constant 0 : index
      %c0_97 = arith.constant 0 : index
      %294 = vector.load %arg5[%c0_96, %c0_97] : memref<32x128xf32, #tpu.memory_space<vmem>>, vector<32x128xf32>
      %cst_98 = arith.constant dense<0.000000e+00> : vector<8x128xf32>
      %295 = tpu.matmul %293, %294, %cst_98 {dimension_numbers = #tpu.dot_dimension_numbers<[1], [0], [0], [1], [0, 0, 1, 1], [], []>} : vector<8x32xf32>, vector<32x128xf32>, vector<8x128xf32> -> vector<8x128xf32>
      %c0_99 = arith.constant 0 : index
      %c0_100 = arith.constant 0 : index
      %296 = vector.load %arg6[%c0_99, %c0_100] : memref<1x128xf32, #tpu.memory_space<vmem>>, vector<1x128xf32>
      %297 = vector.broadcast %296 : vector<1x128xf32> to vector<8x128xf32>
      %298 = arith.addf %295, %297 : vector<8x128xf32>
      %299 = tpu.iota {dimensions = array<i32: 1>} : vector<8x128xi32>
      %c10_i32 = arith.constant 10 : i32
      %300 = vector.broadcast %c10_i32 : i32 to vector<8x128xi32>
      %301 = arith.cmpi slt, %299, %300 : vector<8x128xi32>
      %cst_101 = arith.constant -1.000000e+30 : f32
      %302 = vector.broadcast %cst_101 : f32 to vector<8x128xf32>
      %303 = arith.select %301, %298, %302 : vector<8x128xi1>, vector<8x128xf32>
      %cst_102 = arith.constant dense<0xFF800000> : vector<8xf32>
      %304 = vector.multi_reduction <maximumf>, %303, %cst_102 [1] : vector<8x128xf32> to vector<8xf32>
      %305 = vector.shape_cast %304 : vector<8xf32> to vector<8x1xf32>
      %306 = vector.broadcast %305 : vector<8x1xf32> to vector<8x128xf32>
      %307 = arith.subf %303, %306 : vector<8x128xf32>
      %308 = math.exp %307 : vector<8x128xf32>
      %cst_103 = arith.constant dense<0.000000e+00> : vector<8xf32>
      %309 = vector.multi_reduction <add>, %308, %cst_103 [1] : vector<8x128xf32> to vector<8xf32>
      %310 = vector.shape_cast %309 : vector<8xf32> to vector<8x1xf32>
      %311 = math.log %310 : vector<8x1xf32>
      %312 = vector.broadcast %311 : vector<8x1xf32> to vector<8x128xf32>
      %313 = arith.subf %307, %312 : vector<8x128xf32>
      %c0_104 = arith.constant 0 : index
      %c0_105 = arith.constant 0 : index
      %314 = vector.load %arg9[%c0_104, %c0_105] : memref<8x128xf32, #tpu.memory_space<vmem>>, vector<8x128xf32>
      tpu.vector_store %arg9[%c0_104, %c0_105], %313 {strides = array<i32>} : memref<8x128xf32, #tpu.memory_space<vmem>>, vector<8x128xf32>,
    } else {
    }
    return
  }
  func.func @transform_0(%arg0: i32) -> (i32, i32) {
    %c0_i32 = arith.constant 0 : i32
    %c0_i32_0 = arith.constant 0 : i32
    %c0_i32_1 = arith.constant 0 : i32
    return %c0_i32, %c0_i32_0 : i32, i32
  }
  func.func @transform_1(%arg0: i32) -> (i32, i32, i32) {
    %c0_i32 = arith.constant 0 : i32
    %c0_i32_0 = arith.constant 0 : i32
    %c0_i32_1 = arith.constant 0 : i32
    return %arg0, %c0_i32, %c0_i32_0 : i32, i32, i32
  }
  func.func @transform_2(%arg0: i32) -> (i32, i32, i32) {
    %c0_i32 = arith.constant 0 : i32
    %c0_i32_0 = arith.constant 0 : i32
    %c0_i32_1 = arith.constant 0 : i32
    return %arg0, %c0_i32, %c0_i32_0 : i32, i32, i32
  }
  func.func @transform_3(%arg0: i32) -> (i32, i32, i32) {
    %c0_i32 = arith.constant 0 : i32
    %c0_i32_0 = arith.constant 0 : i32
    %c0_i32_1 = arith.constant 0 : i32
    return %arg0, %c0_i32, %c0_i32_0 : i32, i32, i32
  }
  func.func @transform_4(%arg0: i32) -> (i32, i32) {
    %c0_i32 = arith.constant 0 : i32
    %c0_i32_0 = arith.constant 0 : i32
    %c0_i32_1 = arith.constant 0 : i32
    return %c0_i32, %c0_i32_0 : i32, i32
  }
  func.func @transform_5(%arg0: i32) -> (i32, i32) {
    %c0_i32 = arith.constant 0 : i32
    %c0_i32_0 = arith.constant 0 : i32
    %c0_i32_1 = arith.constant 0 : i32
    return %c0_i32, %c0_i32_0 : i32, i32
  }
  func.func @transform_6(%arg0: i32) -> (i32, i32, i32) {
    %c0_i32 = arith.constant 0 : i32
    %c0_i32_0 = arith.constant 0 : i32
    %c0_i32_1 = arith.constant 0 : i32
    return %arg0, %c0_i32, %c0_i32_0 : i32, i32, i32
  }
  func.func @transform_7(%arg0: i32) -> (i32, i32, i32) {
    %c0_i32 = arith.constant 0 : i32
    %c0_i32_0 = arith.constant 0 : i32
    %c0_i32_1 = arith.constant 0 : i32
    return %arg0, %c0_i32, %c0_i32_0 : i32, i32, i32
  }
  func.func @transform_8(%arg0: i32) -> (i32, i32) {
    %c0_i32 = arith.constant 0 : i32
    %c0_i32_0 = arith.constant 0 : i32
    %c0_i32_1 = arith.constant 0 : i32
    return %c0_i32, %c0_i32_0 : i32, i32
  }
}

</mosaic_0001>

<llo_original>
// kernel: lstm_forward.1
$region0: #{lstm_forward.1}
  #allocation0 [shape = 'u32[]', space=smem, size = 0x4, offset = 0x4, fixed_abs, tag = 'smem constant byte address 0x4 - core index']
  #allocation1 [shape = 'u32[144,128]{1,0:T(1,128)}', space=vmem, size = 0x12000, scoped, tag = 'internal scratch']
  #allocation2 [shape = 'f32[8,32]{1,0:T(8,128)}', space=vmem, size = 0x1000, scoped, tag = 'scratch operand']
  #allocation3 [shape = 'f32[8,128]{1,0:T(8,128)}', space=vmem, size = 0x1000, scoped, tag = 'scratch operand']
  %s0 = inlined_call_operand.vmem [shape: f32[8,32], index: 0, kind: input, shape index: {}]
  %s1 = inlined_call_operand.vmem [shape: f32[2,32,128], index: 1, kind: input, shape index: {}]
  %s2 = inlined_call_operand.vmem [shape: f32[2,32,128], index: 2, kind: input, shape index: {}]
  %s3 = inlined_call_operand.vmem [shape: f32[2,1,128], index: 3, kind: input, shape index: {}]
  %s4 = inlined_call_operand.vmem [shape: f32[32,128], index: 4, kind: input, shape index: {}]
  %s5 = inlined_call_operand.vmem [shape: f32[1,128], index: 5, kind: input, shape index: {}]
  %s6 = inlined_call_operand.vmem [shape: f32[2,1,32], index: 6, kind: input, shape index: {}]
  %s7 = inlined_call_operand.vmem [shape: f32[2,1,32], index: 7, kind: input, shape index: {}]
  %s8 = inlined_call_operand.hbm [shape: f32[8,128], index: 8, kind: output, shape index: {}]
  %s9 = sld [smem:[#allocation0]]
  $region73: #{lstm_forward.1} parent=0
    _
  %s11 = ssub.s32 1, %s9
  %s12 = scalar_select 0, %s11, %s9
  $region1: #{lstm_forward.1} parent=0
    #allocation4 [shape = 'u8[4096]{0}', space=vmem, size = 0x1000, scoped, tag = 'output window, operand 0, single buffered']
    #allocation5 [shape = 's32[2]{0}', space=sflag, size = 0x8, scoped, tag = 'scoped memory for lstm_forward.1']
    %13 = vsyncpa [#allocation5], 0
    loop: start=0, step=1, limit=4
    $region2: #{lstm_forward.1} parent=1 // loop_pre_header
      _
    $region3: #{lstm_forward.1} parent=1 // loop_header
      %s15 = sphi 0, %s19
      %p16 = scmp.ge.s32.totalorder %s15, 4
      %s23 = sphi 0, %s23
      %s25 = sphi 0, %s23
      %s26 = sphi 0, %s25
      %s40 = sphi 0, %s26
      %s46 = sphi 0, %s48
      %s49 = sphi 0, %s46
      %s50 = sphi 0, %s49
      %s66 = sphi 0, %s50
      %s72 = sphi 0, %s74
      %s75 = sphi 0, %s72
      %s76 = sphi 0, %s75
      %s92 = sphi 0, %s76
      %s98 = sphi 0, %s100
      %s101 = sphi 0, %s98
      %s102 = sphi 0, %s101
      %s118 = sphi 0, %s102
      %s122 = sphi 0, %s122
      %s124 = sphi 0, %s122
      %s125 = sphi 0, %s124
      %s139 = sphi 0, %s125
      %s143 = sphi 0, %s143
      %s145 = sphi 0, %s143
      %s146 = sphi 0, %s145
      %s160 = sphi 0, %s146
      %s166 = sphi 0, %s168
      %s169 = sphi 0, %s166
      %s170 = sphi 0, %s169
      %s186 = sphi 0, %s170
      %s192 = sphi 0, %s194
      %s195 = sphi 0, %s192
      %s196 = sphi 0, %s195
      %s212 = sphi 0, %s196
      %s216 = sphi 0, %s216
      %s218 = sphi 0, %s216
      %s219 = sphi 0, %s218
      %s233 = sphi 0, %s219
    $region4: #{lstm_forward.1} parent=1 // loop_header_branch
      %18 = sbr.rel (%p16) target = $region8
    $region5: #{lstm_forward.1} parent=1 // loop_body
      %s20 = ssub.s32 %s15, 1
      %s21 = ssub.s32 %s15, 2
      %s22 = sadd.s32 %s15, 1
      %s24 = sadd.s32 %s23, 1
      %p27 = scmp.eq.s32.totalorder %s15, 1
      %p28 = scmp.ne.s32.totalorder %s23, %s25
      %p29 = scmp.eq.s32.totalorder %s15, 0
      %p30 = por %p28, %p29
      %p31 = scmp.ne.s32.totalorder %s23, %s25
      %p32 = scmp.eq.s32.totalorder %s20, 1
      %p33 = por %p31, %p32
      %p34 = scmp.ne.s32.totalorder %s25, %s26
      %p35 = scmp.eq.s32.totalorder %s20, 0
      %p36 = por %p34, %p35
      %p37 = scmp.ne.s32.totalorder %s25, %s26
      %p38 = scmp.eq.s32.totalorder %s21, 1
      %p39 = por %p37, %p38
      %p41 = scmp.ne.s32.totalorder %s26, %s40
      %p42 = scmp.eq.s32.totalorder %s21, 0
      %p43 = por %p41, %p42
      %s44 = ssub.s32 %s15, %s22
      %p45 = scmp.eq.s32.totalorder %s44, 0
      %s47 = sadd.s32 %s46, 1
      %s48 = scalar_select %p45, %s46, %s47
      %p51 = pneg %p45
      %p52 = scmp.eq.s32.totalorder %s15, 1
      %p53 = por %p51, %p52
      %p54 = scmp.ne.s32.totalorder %s46, %s49
      %p55 = scmp.eq.s32.totalorder %s15, 0
      %p56 = por %p54, %p55
      %p57 = scmp.ne.s32.totalorder %s46, %s49
      %p58 = scmp.eq.s32.totalorder %s20, 1
      %p59 = por %p57, %p58
      %p60 = scmp.ne.s32.totalorder %s49, %s50
      %p61 = scmp.eq.s32.totalorder %s20, 0
      %p62 = por %p60, %p61
      %p63 = scmp.ne.s32.totalorder %s49, %s50
      %p64 = scmp.eq.s32.totalorder %s21, 1
      %p65 = por %p63, %p64
      %p67 = scmp.ne.s32.totalorder %s50, %s66
      %p68 = scmp.eq.s32.totalorder %s21, 0
      %p69 = por %p67, %p68
      %s70 = ssub.s32 %s15, %s22
      %p71 = scmp.eq.s32.totalorder %s70, 0
      %s73 = sadd.s32 %s72, 1
      %s74 = scalar_select %p71, %s72, %s73
      %p77 = pneg %p71
      %p78 = scmp.eq.s32.totalorder %s15, 1
      %p79 = por %p77, %p78
      %p80 = scmp.ne.s32.totalorder %s72, %s75
      %p81 = scmp.eq.s32.totalorder %s15, 0
      %p82 = por %p80, %p81
      %p83 = scmp.ne.s32.totalorder %s72, %s75
      %p84 = scmp.eq.s32.totalorder %s20, 1
      %p85 = por %p83, %p84
      %p86 = scmp.ne.s32.totalorder %s75, %s76
      %p87 = scmp.eq.s32.totalorder %s20, 0
      %p88 = por %p86, %p87
      %p89 = scmp.ne.s32.totalorder %s75, %s76
      %p90 = scmp.eq.s32.totalorder %s21, 1
      %p91 = por %p89, %p90
      %p93 = scmp.ne.s32.totalorder %s76, %s92
      %p94 = scmp.eq.s32.totalorder %s21, 0
      %p95 = por %p93, %p94
      %s96 = ssub.s32 %s15, %s22
      %p97 = scmp.eq.s32.totalorder %s96, 0
      %s99 = sadd.s32 %s98, 1
      %s100 = scalar_select %p97, %s98, %s99
      %p103 = pneg %p97
      %p104 = scmp.eq.s32.totalorder %s15, 1
      %p105 = por %p103, %p104
      %p106 = scmp.ne.s32.totalorder %s98, %s101
      %p107 = scmp.eq.s32.totalorder %s15, 0
      %p108 = por %p106, %p107
      %p109 = scmp.ne.s32.totalorder %s98, %s101
      %p110 = scmp.eq.s32.totalorder %s20, 1
      %p111 = por %p109, %p110
      %p112 = scmp.ne.s32.totalorder %s101, %s102
      %p113 = scmp.eq.s32.totalorder %s20, 0
      %p114 = por %p112, %p113
      %p115 = scmp.ne.s32.totalorder %s101, %s102
      %p116 = scmp.eq.s32.totalorder %s21, 1
      %p117 = por %p115, %p116
      %p119 = scmp.ne.s32.totalorder %s102, %s118
      %p120 = scmp.eq.s32.totalorder %s21, 0
      %p121 = por %p119, %p120
      %s123 = sadd.s32 %s122, 1
      %p126 = scmp.eq.s32.totalorder %s15, 1
      %p127 = scmp.ne.s32.totalorder %s122, %s124
      %p128 = scmp.eq.s32.totalorder %s15, 0
      %p129 = por %p127, %p128
      %p130 = scmp.ne.s32.totalorder %s122, %s124
      %p131 = scmp.eq.s32.totalorder %s20, 1
      %p132 = por %p130, %p131
      %p133 = scmp.ne.s32.totalorder %s124, %s125
      %p134 = scmp.eq.s32.totalorder %s20, 0
      %p135 = por %p133, %p134
      %p136 = scmp.ne.s32.totalorder %s124, %s125
      %p137 = scmp.eq.s32.totalorder %s21, 1
      %p138 = por %p136, %p137
      %p140 = scmp.ne.s32.totalorder %s125, %s139
      %p141 = scmp.eq.s32.totalorder %s21, 0
      %p142 = por %p140, %p141
      %s144 = sadd.s32 %s143, 1
      %p147 = scmp.eq.s32.totalorder %s15, 1
      %p148 = scmp.ne.s32.totalorder %s143, %s145
      %p149 = scmp.eq.s32.totalorder %s15, 0
      %p150 = por %p148, %p149
      %p151 = scmp.ne.s32.totalorder %s143, %s145
      %p152 = scmp.eq.s32.totalorder %s20, 1
      %p153 = por %p151, %p152
      %p154 = scmp.ne.s32.totalorder %s145, %s146
      %p155 = scmp.eq.s32.totalorder %s20, 0
      %p156 = por %p154, %p155
      %p157 = scmp.ne.s32.totalorder %s145, %s146
      %p158 = scmp.eq.s32.totalorder %s21, 1
      %p159 = por %p157, %p158
      %p161 = scmp.ne.s32.totalorder %s146, %s160
      %p162 = scmp.eq.s32.totalorder %s21, 0
      %p163 = por %p161, %p162
      %s164 = ssub.s32 %s15, %s22
      %p165 = scmp.eq.s32.totalorder %s164, 0
      %s167 = sadd.s32 %s166, 1
      %s168 = scalar_select %p165, %s166, %s167
      %p171 = pneg %p165
      %p172 = scmp.eq.s32.totalorder %s15, 1
      %p173 = por %p171, %p172
      %p174 = scmp.ne.s32.totalorder %s166, %s169
      %p175 = scmp.eq.s32.totalorder %s15, 0
      %p176 = por %p174, %p175
      %p177 = scmp.ne.s32.totalorder %s166, %s169
      %p178 = scmp.eq.s32.totalorder %s20, 1
      %p179 = por %p177, %p178
      %p180 = scmp.ne.s32.totalorder %s169, %s170
      %p181 = scmp.eq.s32.totalorder %s20, 0
      %p182 = por %p180, %p181
      %p183 = scmp.ne.s32.totalorder %s169, %s170
      %p184 = scmp.eq.s32.totalorder %s21, 1
      %p185 = por %p183, %p184
      %p187 = scmp.ne.s32.totalorder %s170, %s186
      %p188 = scmp.eq.s32.totalorder %s21, 0
      %p189 = por %p187, %p188
      %s190 = ssub.s32 %s15, %s22
      %p191 = scmp.eq.s32.totalorder %s190, 0
      %s193 = sadd.s32 %s192, 1
      %s194 = scalar_select %p191, %s192, %s193
      %p197 = pneg %p191
      %p198 = scmp.eq.s32.totalorder %s15, 1
      %p199 = por %p197, %p198
      %p200 = scmp.ne.s32.totalorder %s192, %s195
      %p201 = scmp.eq.s32.totalorder %s15, 0
      %p202 = por %p200, %p201
      %p203 = scmp.ne.s32.totalorder %s192, %s195
      %p204 = scmp.eq.s32.totalorder %s20, 1
      %p205 = por %p203, %p204
      %p206 = scmp.ne.s32.totalorder %s195, %s196
      %p207 = scmp.eq.s32.totalorder %s20, 0
      %p208 = por %p206, %p207
      %p209 = scmp.ne.s32.totalorder %s195, %s196
      %p210 = scmp.eq.s32.totalorder %s21, 1
      %p211 = por %p209, %p210
      %p213 = scmp.ne.s32.totalorder %s196, %s212
      %p214 = scmp.eq.s32.totalorder %s21, 0
      %p215 = por %p213, %p214
      %s217 = sadd.s32 %s216, 1
      %p220 = scmp.eq.s32.totalorder %s15, 1
      %p221 = scmp.ne.s32.totalorder %s216, %s218
      %p222 = scmp.eq.s32.totalorder %s15, 0
      %p223 = por %p221, %p222
      %p224 = scmp.ne.s32.totalorder %s216, %s218
      %p225 = scmp.eq.s32.totalorder %s20, 1
      %p226 = por %p224, %p225
      %p227 = scmp.ne.s32.totalorder %s218, %s219
      %p228 = scmp.eq.s32.totalorder %s20, 0
      %p229 = por %p227, %p228
      %p230 = scmp.ne.s32.totalorder %s218, %s219
      %p231 = scmp.eq.s32.totalorder %s21, 1
      %p232 = por %p230, %p231
      %p234 = scmp.ne.s32.totalorder %s219, %s233
      %p235 = scmp.eq.s32.totalorder %s21, 0
      %p236 = por %p234, %p235
      %p237 = scmp.le.s32.totalorder 1, %s15
      %p238 = scmp.lt.s32.totalorder %s15, 3
      %p239 = pnand %p237, %p238
      %p240 = pneg %p239
      // Predicated region
      $region9: #{lstm_forward.1} parent=5 // pred_check
        _
      $region10: #{lstm_forward.1} parent=5 // pred_check_branch
        %242 = sbr.rel (%p239) target = $region12
      $region11: #{lstm_forward.1} parent=5 // pred_region
        %s243 = ssub.s32 %s15, 1
        // Predicated region
        $region13: #{lstm_forward.1} parent=11 // pred_check
          %p244 = pneg %p36
        $region14: #{lstm_forward.1} parent=11 // pred_check_branch
          %246 = sbr.rel (%p244) target = $region16
        $region15: #{lstm_forward.1} parent=11 // pred_region
          _
        $region16: #{lstm_forward.1} parent=11 // pred_fallthru
          _
        // Predicated region
        $region17: #{lstm_forward.1} parent=11 // pred_check
          %p247 = pneg %p135
        $region18: #{lstm_forward.1} parent=11 // pred_check_branch
          %249 = sbr.rel (%p247) target = $region20
        $region19: #{lstm_forward.1} parent=11 // pred_region
          _
        $region20: #{lstm_forward.1} parent=11 // pred_fallthru
          _
        // Predicated region
        $region21: #{lstm_forward.1} parent=11 // pred_check
          %p250 = pneg %p156
        $region22: #{lstm_forward.1} parent=11 // pred_check_branch
          %252 = sbr.rel (%p250) target = $region24
        $region23: #{lstm_forward.1} parent=11 // pred_region
          _
        $region24: #{lstm_forward.1} parent=11 // pred_fallthru
          _
      $region12: #{lstm_forward.1} parent=5 // pred_fallthru
        _
      %p253 = scmp.lt.s32.totalorder %s15, 2
      // Predicated region
      $region25: #{lstm_forward.1} parent=5 // pred_check
        %p254 = pneg %p253
      $region26: #{lstm_forward.1} parent=5 // pred_check_branch
        %256 = sbr.rel (%p254) target = $region28
      $region27: #{lstm_forward.1} parent=5 // pred_region
        // Predicated region
        $region29: #{lstm_forward.1} parent=27 // pred_check
          %p257 = pneg %p56
        $region30: #{lstm_forward.1} parent=27 // pred_check_branch
          %259 = sbr.rel (%p257) target = $region32
        $region31: #{lstm_forward.1} parent=27 // pred_region
          %p260 = scmp.lt.s32.totalorder %s15, 1
          %s261 = scalar_select %p260, %s15, 1
          %s262 = smul.addr %s261, 4
          %s263 = smul.addr %s262, 8
          %s264 = scalar_lea.vmem %s1, %s263
        $region32: #{lstm_forward.1} parent=27 // pred_fallthru
          _
        // Predicated region
        $region33: #{lstm_forward.1} parent=27 // pred_check
          %p265 = pneg %p82
        $region34: #{lstm_forward.1} parent=27 // pred_check_branch
          %267 = sbr.rel (%p265) target = $region36
        $region35: #{lstm_forward.1} parent=27 // pred_region
          %p268 = scmp.lt.s32.totalorder %s15, 1
          %s269 = scalar_select %p268, %s15, 1
          %s270 = smul.addr %s269, 4
          %s271 = smul.addr %s270, 8
          %s272 = scalar_lea.vmem %s2, %s271
        $region36: #{lstm_forward.1} parent=27 // pred_fallthru
          _
        // Predicated region
        $region37: #{lstm_forward.1} parent=27 // pred_check
          %p273 = pneg %p108
        $region38: #{lstm_forward.1} parent=27 // pred_check_branch
          %275 = sbr.rel (%p273) target = $region40
        $region39: #{lstm_forward.1} parent=27 // pred_region
          %p276 = scmp.lt.s32.totalorder %s15, 1
          %s277 = scalar_select %p276, %s15, 1
          %s278 = scalar_lea.vmem %s3, %s277
        $region40: #{lstm_forward.1} parent=27 // pred_fallthru
          _
        // Predicated region
        $region41: #{lstm_forward.1} parent=27 // pred_check
          %p279 = pneg %p176
        $region42: #{lstm_forward.1} parent=27 // pred_check_branch
          %281 = sbr.rel (%p279) target = $region44
        $region43: #{lstm_forward.1} parent=27 // pred_region
          %p282 = scmp.lt.s32.totalorder %s15, 1
          %s283 = scalar_select %p282, %s15, 1
          %s284 = scalar_lea.vmem %s6, %s283
        $region44: #{lstm_forward.1} parent=27 // pred_fallthru
          _
        // Predicated region
        $region45: #{lstm_forward.1} parent=27 // pred_check
          %p285 = pneg %p202
        $region46: #{lstm_forward.1} parent=27 // pred_check_branch
          %287 = sbr.rel (%p285) target = $region48
        $region47: #{lstm_forward.1} parent=27 // pred_region
          %p288 = scmp.lt.s32.totalorder %s15, 1
          %s289 = scalar_select %p288, %s15, 1
          %s290 = scalar_lea.vmem %s7, %s289
        $region48: #{lstm_forward.1} parent=27 // pred_fallthru
          _
      $region28: #{lstm_forward.1} parent=5 // pred_fallthru
        _
      %p291 = scmp.le.s32.totalorder 1, %s15
      %p292 = scmp.lt.s32.totalorder %s15, 3
      %p293 = pnand %p291, %p292
      %p294 = pneg %p293
      // Predicated region
      $region49: #{lstm_forward.1} parent=5 // pred_check
        _
      $region50: #{lstm_forward.1} parent=5 // pred_check_branch
        %296 = sbr.rel (%p293) target = $region52
      $region51: #{lstm_forward.1} parent=5 // pred_region
        %s297 = ssub.s32 %s15, 1
        %p298 = pneg %p36
        %p299 = pneg %p33
        %p300 = scmp.lt.s32.totalorder %s20, 1
        %s301 = scalar_select %p300, %s20, 1
        %s302 = smul.addr %s301, 4
        %s303 = smul.addr %s302, 8
        %s304 = scalar_lea.vmem %s1, %s303
        %p305 = pneg %p62
        %p306 = pneg %p59
        %p307 = scmp.lt.s32.totalorder %s20, 1
        %s308 = scalar_select %p307, %s20, 1
        %s309 = smul.addr %s308, 4
        %s310 = smul.addr %s309, 8
        %s311 = scalar_lea.vmem %s2, %s310
        %p312 = pneg %p88
        %p313 = pneg %p85
        %p314 = scmp.lt.s32.totalorder %s20, 1
        %s315 = scalar_select %p314, %s20, 1
        %s316 = scalar_lea.vmem %s3, %s315
        %p317 = pneg %p114
        %p318 = pneg %p111
        %p319 = pneg %p135
        %p320 = pneg %p132
        %p321 = pneg %p156
        %p322 = pneg %p153
        %p323 = scmp.lt.s32.totalorder %s20, 1
        %s324 = scalar_select %p323, %s20, 1
        %s325 = scalar_lea.vmem %s6, %s324
        %p326 = pneg %p182
        %p327 = pneg %p179
        %p328 = scmp.lt.s32.totalorder %s20, 1
        %s329 = scalar_select %p328, %s20, 1
        %s330 = scalar_lea.vmem %s7, %s329
        %p331 = pneg %p208
        %p332 = pneg %p205
        %p333 = pneg %p229
        %p334 = pneg %p226
        %p335 = scmp.lt.s32.totalorder %s20, 1
        %s336 = scalar_select %p335, %s20, 1
        %s337 = smul.addr %s336, 4
        %s338 = smul.addr %s337, 8
        %s339 = scalar_lea.vmem %s1, %s338
        %p340 = scmp.lt.s32.totalorder %s20, 1
        %s341 = scalar_select %p340, %s20, 1
        %s342 = smul.addr %s341, 4
        %s343 = smul.addr %s342, 8
        %s344 = scalar_lea.vmem %s2, %s343
        %p345 = scmp.lt.s32.totalorder %s20, 1
        %s346 = scalar_select %p345, %s20, 1
        %s347 = scalar_lea.vmem %s3, %s346
        %p348 = scmp.lt.s32.totalorder %s20, 1
        %s349 = scalar_select %p348, %s20, 1
        %s350 = scalar_lea.vmem %s6, %s349
        %p351 = scmp.lt.s32.totalorder %s20, 1
        %s352 = scalar_select %p351, %s20, 1
        %s353 = scalar_lea.vmem %s7, %s352
        %p354 = scmp.eq.s32.totalorder %s20, 0
        // Predicated region
        $region53: #{lstm_forward.1} parent=51 // pred_check
          %p355 = pneg %p354
        $region54: #{lstm_forward.1} parent=51 // pred_check_branch
          %357 = sbr.rel (%p355) target = $region56
        $region55: #{lstm_forward.1} parent=51 // pred_region
          %v358 = vld [vmem:[%s0] sm:$0xff]
          %vm359 = vcmask 261120
          %360 = vst.msk [vmem:[#allocation2] sm:$0xff] %vm359, %v358
        $region56: #{lstm_forward.1} parent=51 // pred_fallthru
          _
        %v361 = vld [vmem:[#allocation2] sm:$0xff]
        %v362 = vld [vmem:[%s339] sm:$0xff]
        %v363 = vld [vmem:[%s339 + $0x8] sm:$0xff]
        %v364 = vld [vmem:[%s339 + $0x10] sm:$0xff]
        %v365 = vld [vmem:[%s339 + $0x18] sm:$0xff]
        %v366 = vld [vmem:[%s347] sm:$0x1]
        %v368 = vlaneseq
        %v369 = vshrl.u32 %v368, 7
        %v370 = vsub.s32 0, %v369
        %v371 = vrot.slane %v366, %v370
        %vm373 = vcmask 261120
        %v375 = vsel %vm373, %v361, 0
        %377 = vmatprep.subr.mxu0 0.0
        %378 = vmatpush1.msra.mxu0 %v362
        %379 = vmatprep.subr.mxu0 0.0
        %380 = vmatpush1.msra.mxu0 %v363
        %381 = vmatprep.subr.mxu0 0.0
        %382 = vmatpush1.msra.mxu0 %v364
        %383 = vmatprep.subr.mxu0 0.0
        %384 = vmatpush1.msra.mxu0 %v365
        %385 = vmatprep.subr.mxu0 0.0
        %386 = vmatpush1.msra.mxu0 0.0
        %387 = vmatprep.subr.mxu0 0.0
        %388 = vmatpush1.msra.mxu0 0.0
        %389 = vmatprep.subr.mxu0 0.0
        %390 = vmatpush1.msra.mxu0 0.0
        %391 = vmatprep.subr.mxu0 0.0
        %392 = vmatpush1.msra.mxu0 0.0
        %393 = vmatprep.subr.mxu0 0.0
        %394 = vmatpush1.msra.mxu0 0.0
        %395 = vmatprep.subr.mxu0 0.0
        %396 = vmatpush1.msra.mxu0 0.0
        %397 = vmatprep.subr.mxu0 0.0
        %398 = vmatpush1.msra.mxu0 0.0
        %399 = vmatprep.subr.mxu0 0.0
        %400 = vmatpush1.msra.mxu0 0.0
        %401 = vmatprep.subr.mxu0 0.0
        %402 = vmatpush1.msra.mxu0 0.0
        %403 = vmatprep.subr.mxu0 0.0
        %404 = vmatpush1.msra.mxu0 0.0
        %405 = vmatprep.subr.mxu0 0.0
        %406 = vmatpush1.msra.mxu0 0.0
        %407 = vmatprep.subr.mxu0 0.0
        %408 = vmatpush1.msra.mxu0 0.0
        %409 = vmatprep.subr.mxu0 0.0
        %410 = vmatpush1.msra.mxu0 0.0
        %411 = vmatprep.subr.mxu0 0.0
        %412 = vmatpush1.msra.mxu0 0.0
        %413 = vmatprep.subr.mxu0 0.0
        %414 = vmatpush1.msra.mxu0 0.0
        %415 = vmatprep.subr.mxu0 0.0
        %416 = vmatpush1.msra.mxu0 0.0
        %417 = vmatprep.subr.mxu0 0.0
        %418 = vmatpush1.msra.mxu0 0.0
        %419 = vmatprep.subr.mxu0 0.0
        %420 = vmatpush1.msra.mxu0 0.0
        %421 = vmatprep.subr.mxu0 0.0
        %422 = vmatpush1.msra.mxu0 0.0
        %423 = vmatprep.subr.mxu0 0.0
        %424 = vmatpush1.msra.mxu0 0.0
        %425 = vmatprep.subr.mxu0 0.0
        %426 = vmatpush1.msra.mxu0 0.0
        %427 = vmatprep.subr.mxu0 0.0
        %428 = vmatpush1.msra.mxu0 0.0
        %429 = vmatprep.subr.mxu0 0.0
        %430 = vmatpush1.msra.mxu0 0.0
        %431 = vmatprep.subr.mxu0 0.0
        %432 = vmatpush1.msra.mxu0 0.0
        %433 = vmatprep.subr.mxu0 0.0
        %434 = vmatpush1.msra.mxu0 0.0
        %435 = vmatprep.subr.mxu0 0.0
        %436 = vmatpush1.msra.mxu0 0.0
        %437 = vmatprep.subr.mxu0 0.0
        %438 = vmatpush1.msra.mxu0 0.0
        %439 = vmatprep.subr.mxu0 0.0
        %440 = vmatpush1.msra.mxu0 0.0
        %441 = vmatprep.mubr.f32.mxu0 0.0
        %442 = vmatmul.mubr.f32.gmra.mrb[0].mxu0 %v375
        %v443 = vpop.f32.mrb[0].mxu0
        %v444 = vadd.f32 %v371, %v443
        %v445 = vpop.f32.mrb[0].mxu0
        %446 = vdwg.mxu0
        %447 = vst [vmem:[#allocation3] sm:$0xff] %v444
        %v448 = vld [vmem:[%s344] sm:$0xff]
        %v449 = vld [vmem:[%s344 + $0x8] sm:$0xff]
        %v450 = vld [vmem:[%s344 + $0x10] sm:$0xff]
        %v451 = vld [vmem:[%s344 + $0x18] sm:$0xff]
        %v452 = vld [vmem:[%s350] sm:$0x1]
        %v453 = vld [vmem:[%s353] sm:$0x1]
        %v454 = vld [vmem:[#allocation3] sm:$0x1]
        %v456 = vsel %vm373, %v452, 0
        %458 = vmatprep.subr.mxu0 0.0
        %459 = vmatpush1.msra.mxu0 %v448
        %460 = vmatprep.subr.mxu0 0.0
        %461 = vmatpush1.msra.mxu0 %v449
        %462 = vmatprep.subr.mxu0 0.0
        %463 = vmatpush1.msra.mxu0 %v450
        %464 = vmatprep.subr.mxu0 0.0
        %465 = vmatpush1.msra.mxu0 %v451
        %466 = vmatprep.subr.mxu0 0.0
        %467 = vmatpush1.msra.mxu0 0.0
        %468 = vmatprep.subr.mxu0 0.0
        %469 = vmatpush1.msra.mxu0 0.0
        %470 = vmatprep.subr.mxu0 0.0
        %471 = vmatpush1.msra.mxu0 0.0
        %472 = vmatprep.subr.mxu0 0.0
        %473 = vmatpush1.msra.mxu0 0.0
        %474 = vmatprep.subr.mxu0 0.0
        %475 = vmatpush1.msra.mxu0 0.0
        %476 = vmatprep.subr.mxu0 0.0
        %477 = vmatpush1.msra.mxu0 0.0
        %478 = vmatprep.subr.mxu0 0.0
        %479 = vmatpush1.msra.mxu0 0.0
        %480 = vmatprep.subr.mxu0 0.0
        %481 = vmatpush1.msra.mxu0 0.0
        %482 = vmatprep.subr.mxu0 0.0
        %483 = vmatpush1.msra.mxu0 0.0
        %484 = vmatprep.subr.mxu0 0.0
        %485 = vmatpush1.msra.mxu0 0.0
        %486 = vmatprep.subr.mxu0 0.0
        %487 = vmatpush1.msra.mxu0 0.0
        %488 = vmatprep.subr.mxu0 0.0
        %489 = vmatpush1.msra.mxu0 0.0
        %490 = vmatprep.subr.mxu0 0.0
        %491 = vmatpush1.msra.mxu0 0.0
        %492 = vmatprep.subr.mxu0 0.0
        %493 = vmatpush1.msra.mxu0 0.0
        %494 = vmatprep.subr.mxu0 0.0
        %495 = vmatpush1.msra.mxu0 0.0
        %496 = vmatprep.subr.mxu0 0.0
        %497 = vmatpush1.msra.mxu0 0.0
        %498 = vmatprep.subr.mxu0 0.0
        %499 = vmatpush1.msra.mxu0 0.0
        %500 = vmatprep.subr.mxu0 0.0
        %501 = vmatpush1.msra.mxu0 0.0
        %502 = vmatprep.subr.mxu0 0.0
        %503 = vmatpush1.msra.mxu0 0.0
        %504 = vmatprep.subr.mxu0 0.0
        %505 = vmatpush1.msra.mxu0 0.0
        %506 = vmatprep.subr.mxu0 0.0
        %507 = vmatpush1.msra.mxu0 0.0
        %508 = vmatprep.subr.mxu0 0.0
        %509 = vmatpush1.msra.mxu0 0.0
        %510 = vmatprep.subr.mxu0 0.0
        %511 = vmatpush1.msra.mxu0 0.0
        %512 = vmatprep.subr.mxu0 0.0
        %513 = vmatpush1.msra.mxu0 0.0
        %514 = vmatprep.subr.mxu0 0.0
        %515 = vmatpush1.msra.mxu0 0.0
        %516 = vmatprep.subr.mxu0 0.0
        %517 = vmatpush1.msra.mxu0 0.0
        %518 = vmatprep.subr.mxu0 0.0
        %519 = vmatpush1.msra.mxu0 0.0
        %520 = vmatprep.subr.mxu0 0.0
        %521 = vmatpush1.msra.mxu0 0.0
        %522 = vmatprep.mubr.f32.mxu0 0.0
        %523 = vmatmul.mubr.f32.gmra.mrb[0].mxu0 %v456
        %v524 = vpop.f32.mrb[0].mxu0
        %v525 = vadd.f32 0.0, %v524
        %v526 = vpop.f32.mrb[0].mxu0
        %527 = vdwg.mxu0
        %v528 = vadd.f32 %v454, %v525
        %v529 = vsub.f32 0.0, %v528
        %v530 = vmul.f32 %v529, 1.442695
        %v531 = vpow.pop %v530
        %v532 = vadd.f32 %v531, 1.0
        %v533 = vrcp.pop %v532
        %v534 = vtanh.pop %v528
        %v536 = vlaneseq
        %v537 = vshrl.u32 %v536, 7
        %v538 = vsub.s32 0, %v537
        %v539 = vrot.slane %v453, %v538
        %540 = vrot.lane.b32.xlu0 %v539, 32
        %v541 = vpop.permute.xlu0 %540
        %v543 = vmul.f32 %v533, %v541
        %545 = vrot.lane.b32.xlu0 %v534, 64
        %v546 = vpop.permute.xlu0 %545
        %v548 = vmul.f32 %v533, %v546
        %550 = vrot.lane.b32.xlu0 %v548, 32
        %v551 = vpop.permute.xlu0 %550
        %v553 = vadd.f32 %v543, %v551
        %v554 = vtanh.pop %v553
        %556 = vrot.lane.b32.xlu0 %v554, 64
        %v557 = vpop.permute.xlu0 %556
        %v559 = vmul.f32 %v533, %v557
        %561 = vrot.lane.b32.xlu0 %v559, 32
        %v562 = vpop.permute.xlu0 %561
        %vm564 = vcmask 253952
        %565 = vst.msk [vmem:[#allocation2] sm:$0x1] %vm564, %v562
        %v566 = vld [vmem:[#allocation3 + $0x1] sm:$0x1]
        %v567 = vsel %vm373, %v562, 0
        %569 = vmatprep.subr.mxu0 0.0
        %570 = vmatpush1.msra.mxu0 %v448
        %571 = vmatprep.subr.mxu0 0.0
        %572 = vmatpush1.msra.mxu0 %v449
        %573 = vmatprep.subr.mxu0 0.0
        %574 = vmatpush1.msra.mxu0 %v450
        %575 = vmatprep.subr.mxu0 0.0
        %576 = vmatpush1.msra.mxu0 %v451
        %577 = vmatprep.subr.mxu0 0.0
        %578 = vmatpush1.msra.mxu0 0.0
        %579 = vmatprep.subr.mxu0 0.0
        %580 = vmatpush1.msra.mxu0 0.0
        %581 = vmatprep.subr.mxu0 0.0
        %582 = vmatpush1.msra.mxu0 0.0
        %583 = vmatprep.subr.mxu0 0.0
        %584 = vmatpush1.msra.mxu0 0.0
        %585 = vmatprep.subr.mxu0 0.0
        %586 = vmatpush1.msra.mxu0 0.0
        %587 = vmatprep.subr.mxu0 0.0
        %588 = vmatpush1.msra.mxu0 0.0
        %589 = vmatprep.subr.mxu0 0.0
        %590 = vmatpush1.msra.mxu0 0.0
        %591 = vmatprep.subr.mxu0 0.0
        %592 = vmatpush1.msra.mxu0 0.0
        %593 = vmatprep.subr.mxu0 0.0
        %594 = vmatpush1.msra.mxu0 0.0
        %595 = vmatprep.subr.mxu0 0.0
        %596 = vmatpush1.msra.mxu0 0.0
        %597 = vmatprep.subr.mxu0 0.0
        %598 = vmatpush1.msra.mxu0 0.0
        %599 = vmatprep.subr.mxu0 0.0
        %600 = vmatpush1.msra.mxu0 0.0
        %601 = vmatprep.subr.mxu0 0.0
        %602 = vmatpush1.msra.mxu0 0.0
        %603 = vmatprep.subr.mxu0 0.0
        %604 = vmatpush1.msra.mxu0 0.0
        %605 = vmatprep.subr.mxu0 0.0
        %606 = vmatpush1.msra.mxu0 0.0
        %607 = vmatprep.subr.mxu0 0.0
        %608 = vmatpush1.msra.mxu0 0.0
        %609 = vmatprep.subr.mxu0 0.0
        %610 = vmatpush1.msra.mxu0 0.0
        %611 = vmatprep.subr.mxu0 0.0
        %612 = vmatpush1.msra.mxu0 0.0
        %613 = vmatprep.subr.mxu0 0.0
        %614 = vmatpush1.msra.mxu0 0.0
        %615 = vmatprep.subr.mxu0 0.0
        %616 = vmatpush1.msra.mxu0 0.0
        %617 = vmatprep.subr.mxu0 0.0
        %618 = vmatpush1.msra.mxu0 0.0
        %619 = vmatprep.subr.mxu0 0.0
        %620 = vmatpush1.msra.mxu0 0.0
        %621 = vmatprep.subr.mxu0 0.0
        %622 = vmatpush1.msra.mxu0 0.0
        %623 = vmatprep.subr.mxu0 0.0
        %624 = vmatpush1.msra.mxu0 0.0
        %625 = vmatprep.subr.mxu0 0.0
        %626 = vmatpush1.msra.mxu0 0.0
        %627 = vmatprep.subr.mxu0 0.0
        %628 = vmatpush1.msra.mxu0 0.0
        %629 = vmatprep.subr.mxu0 0.0
        %630 = vmatpush1.msra.mxu0 0.0
        %631 = vmatprep.subr.mxu0 0.0
        %632 = vmatpush1.msra.mxu0 0.0
        %633 = vmatprep.mubr.f32.mxu0 0.0
        %634 = vmatmul.mubr.f32.gmra.mrb[0].mxu0 %v567
        %v635 = vpop.f32.mrb[0].mxu0
        %v636 = vadd.f32 0.0, %v635
        %v637 = vpop.f32.mrb[0].mxu0
        %638 = vdwg.mxu0
        %v639 = vadd.f32 %v566, %v636
        %v640 = vsub.f32 0.0, %v639
        %v641 = vmul.f32 %v640, 1.442695
        %v642 = vpow.pop %v641
        %v643 = vadd.f32 %v642, 1.0
        %v644 = vrcp.pop %v643
        %v645 = vtanh.pop %v639
        %v646 = vmul.f32 %v644, %v553
        %648 = vrot.lane.b32.xlu0 %v645, 64
        %v649 = vpop.permute.xlu0 %648
        %v651 = vmul.f32 %v644, %v649
        %653 = vrot.lane.b32.xlu0 %v651, 32
        %v654 = vpop.permute.xlu0 %653
        %v656 = vadd.f32 %v646, %v654
        %v657 = vtanh.pop %v656
        %659 = vrot.lane.b32.xlu0 %v657, 64
        %v660 = vpop.permute.xlu0 %659
        %v662 = vmul.f32 %v644, %v660
        %664 = vrot.lane.b32.xlu0 %v662, 32
        %v665 = vpop.permute.xlu0 %664
        %667 = vst.msk [vmem:[#allocation2 + $0x1] sm:$0x1] %vm564, %v665
        %v668 = vld [vmem:[#allocation3 + $0x2] sm:$0x1]
        %v669 = vsel %vm373, %v665, 0
        %671 = vmatprep.subr.mxu0 0.0
        %672 = vmatpush1.msra.mxu0 %v448
        %673 = vmatprep.subr.mxu0 0.0
        %674 = vmatpush1.msra.mxu0 %v449
        %675 = vmatprep.subr.mxu0 0.0
        %676 = vmatpush1.msra.mxu0 %v450
        %677 = vmatprep.subr.mxu0 0.0
        %678 = vmatpush1.msra.mxu0 %v451
        %679 = vmatprep.subr.mxu0 0.0
        %680 = vmatpush1.msra.mxu0 0.0
        %681 = vmatprep.subr.mxu0 0.0
        %682 = vmatpush1.msra.mxu0 0.0
        %683 = vmatprep.subr.mxu0 0.0
        %684 = vmatpush1.msra.mxu0 0.0
        %685 = vmatprep.subr.mxu0 0.0
        %686 = vmatpush1.msra.mxu0 0.0
        %687 = vmatprep.subr.mxu0 0.0
        %688 = vmatpush1.msra.mxu0 0.0
        %689 = vmatprep.subr.mxu0 0.0
        %690 = vmatpush1.msra.mxu0 0.0
        %691 = vmatprep.subr.mxu0 0.0
        %692 = vmatpush1.msra.mxu0 0.0
        %693 = vmatprep.subr.mxu0 0.0
        %694 = vmatpush1.msra.mxu0 0.0
        %695 = vmatprep.subr.mxu0 0.0
        %696 = vmatpush1.msra.mxu0 0.0
        %697 = vmatprep.subr.mxu0 0.0
        %698 = vmatpush1.msra.mxu0 0.0
        %699 = vmatprep.subr.mxu0 0.0
        %700 = vmatpush1.msra.mxu0 0.0
        %701 = vmatprep.subr.mxu0 0.0
        %702 = vmatpush1.msra.mxu0 0.0
        %703 = vmatprep.subr.mxu0 0.0
        %704 = vmatpush1.msra.mxu0 0.0
        %705 = vmatprep.subr.mxu0 0.0
        %706 = vmatpush1.msra.mxu0 0.0
        %707 = vmatprep.subr.mxu0 0.0
        %708 = vmatpush1.msra.mxu0 0.0
        %709 = vmatprep.subr.mxu0 0.0
        %710 = vmatpush1.msra.mxu0 0.0
        %711 = vmatprep.subr.mxu0 0.0
        %712 = vmatpush1.msra.mxu0 0.0
        %713 = vmatprep.subr.mxu0 0.0
        %714 = vmatpush1.msra.mxu0 0.0
        %715 = vmatprep.subr.mxu0 0.0
        %716 = vmatpush1.msra.mxu0 0.0
        %717 = vmatprep.subr.mxu0 0.0
        %718 = vmatpush1.msra.mxu0 0.0
        %719 = vmatprep.subr.mxu0 0.0
        %720 = vmatpush1.msra.mxu0 0.0
        %721 = vmatprep.subr.mxu0 0.0
        %722 = vmatpush1.msra.mxu0 0.0
        %723 = vmatprep.subr.mxu0 0.0
        %724 = vmatpush1.msra.mxu0 0.0
        %725 = vmatprep.subr.mxu0 0.0
        %726 = vmatpush1.msra.mxu0 0.0
        %727 = vmatprep.subr.mxu0 0.0
        %728 = vmatpush1.msra.mxu0 0.0
        %729 = vmatprep.subr.mxu0 0.0
        %730 = vmatpush1.msra.mxu0 0.0
        %731 = vmatprep.subr.mxu0 0.0
        %732 = vmatpush1.msra.mxu0 0.0
        %733 = vmatprep.subr.mxu0 0.0
        %734 = vmatpush1.msra.mxu0 0.0
        %735 = vmatprep.mubr.f32.mxu0 0.0
        %736 = vmatmul.mubr.f32.gmra.mrb[0].mxu0 %v669
        %v737 = vpop.f32.mrb[0].mxu0
        %v738 = vadd.f32 0.0, %v737
        %v739 = vpop.f32.mrb[0].mxu0
        %740 = vdwg.mxu0
        %v741 = vadd.f32 %v668, %v738
        %v742 = vsub.f32 0.0, %v741
        %v743 = vmul.f32 %v742, 1.442695
        %v744 = vpow.pop %v743
        %v745 = vadd.f32 %v744, 1.0
        %v746 = vrcp.pop %v745
        %v747 = vtanh.pop %v741
        %v748 = vmul.f32 %v746, %v656
        %750 = vrot.lane.b32.xlu0 %v747, 64
        %v751 = vpop.permute.xlu0 %750
        %v753 = vmul.f32 %v746, %v751
        %755 = vrot.lane.b32.xlu0 %v753, 32
        %v756 = vpop.permute.xlu0 %755
        %v758 = vadd.f32 %v748, %v756
        %v759 = vtanh.pop %v758
        %761 = vrot.lane.b32.xlu0 %v759, 64
        %v762 = vpop.permute.xlu0 %761
        %v764 = vmul.f32 %v746, %v762
        %766 = vrot.lane.b32.xlu0 %v764, 32
        %v767 = vpop.permute.xlu0 %766
        %769 = vst.msk [vmem:[#allocation2 + $0x2] sm:$0x1] %vm564, %v767
        %v770 = vld [vmem:[#allocation3 + $0x3] sm:$0x1]
        %v771 = vsel %vm373, %v767, 0
        %773 = vmatprep.subr.mxu0 0.0
        %774 = vmatpush1.msra.mxu0 %v448
        %775 = vmatprep.subr.mxu0 0.0
        %776 = vmatpush1.msra.mxu0 %v449
        %777 = vmatprep.subr.mxu0 0.0
        %778 = vmatpush1.msra.mxu0 %v450
        %779 = vmatprep.subr.mxu0 0.0
        %780 = vmatpush1.msra.mxu0 %v451
        %781 = vmatprep.subr.mxu0 0.0
        %782 = vmatpush1.msra.mxu0 0.0
        %783 = vmatprep.subr.mxu0 0.0
        %784 = vmatpush1.msra.mxu0 0.0
        %785 = vmatprep.subr.mxu0 0.0
        %786 = vmatpush1.msra.mxu0 0.0
        %787 = vmatprep.subr.mxu0 0.0
        %788 = vmatpush1.msra.mxu0 0.0
        %789 = vmatprep.subr.mxu0 0.0
        %790 = vmatpush1.msra.mxu0 0.0
        %791 = vmatprep.subr.mxu0 0.0
        %792 = vmatpush1.msra.mxu0 0.0
        %793 = vmatprep.subr.mxu0 0.0
        %794 = vmatpush1.msra.mxu0 0.0
        %795 = vmatprep.subr.mxu0 0.0
        %796 = vmatpush1.msra.mxu0 0.0
        %797 = vmatprep.subr.mxu0 0.0
        %798 = vmatpush1.msra.mxu0 0.0
        %799 = vmatprep.subr.mxu0 0.0
        %800 = vmatpush1.msra.mxu0 0.0
        %801 = vmatprep.subr.mxu0 0.0
        %802 = vmatpush1.msra.mxu0 0.0
        %803 = vmatprep.subr.mxu0 0.0
        %804 = vmatpush1.msra.mxu0 0.0
        %805 = vmatprep.subr.mxu0 0.0
        %806 = vmatpush1.msra.mxu0 0.0
        %807 = vmatprep.subr.mxu0 0.0
        %808 = vmatpush1.msra.mxu0 0.0
        %809 = vmatprep.subr.mxu0 0.0
        %810 = vmatpush1.msra.mxu0 0.0
        %811 = vmatprep.subr.mxu0 0.0
        %812 = vmatpush1.msra.mxu0 0.0
        %813 = vmatprep.subr.mxu0 0.0
        %814 = vmatpush1.msra.mxu0 0.0
        %815 = vmatprep.subr.mxu0 0.0
        %816 = vmatpush1.msra.mxu0 0.0
        %817 = vmatprep.subr.mxu0 0.0
        %818 = vmatpush1.msra.mxu0 0.0
        %819 = vmatprep.subr.mxu0 0.0
        %820 = vmatpush1.msra.mxu0 0.0
        %821 = vmatprep.subr.mxu0 0.0
        %822 = vmatpush1.msra.mxu0 0.0
        %823 = vmatprep.subr.mxu0 0.0
        %824 = vmatpush1.msra.mxu0 0.0
        %825 = vmatprep.subr.mxu0 0.0
        %826 = vmatpush1.msra.mxu0 0.0
        %827 = vmatprep.subr.mxu0 0.0
        %828 = vmatpush1.msra.mxu0 0.0
        %829 = vmatprep.subr.mxu0 0.0
        %830 = vmatpush1.msra.mxu0 0.0
        %831 = vmatprep.subr.mxu0 0.0
        %832 = vmatpush1.msra.mxu0 0.0
        %833 = vmatprep.subr.mxu0 0.0
        %834 = vmatpush1.msra.mxu0 0.0
        %835 = vmatprep.subr.mxu0 0.0
        %836 = vmatpush1.msra.mxu0 0.0
        %837 = vmatprep.mubr.f32.mxu0 0.0
        %838 = vmatmul.mubr.f32.gmra.mrb[0].mxu0 %v771
        %v839 = vpop.f32.mrb[0].mxu0
        %v840 = vadd.f32 0.0, %v839
        %v841 = vpop.f32.mrb[0].mxu0
        %842 = vdwg.mxu0
        %v843 = vadd.f32 %v770, %v840
        %v844 = vsub.f32 0.0, %v843
        %v845 = vmul.f32 %v844, 1.442695
        %v846 = vpow.pop %v845
        %v847 = vadd.f32 %v846, 1.0
        %v848 = vrcp.pop %v847
        %v849 = vtanh.pop %v843
        %v850 = vmul.f32 %v848, %v758
        %852 = vrot.lane.b32.xlu0 %v849, 64
        %v853 = vpop.permute.xlu0 %852
        %v855 = vmul.f32 %v848, %v853
        %857 = vrot.lane.b32.xlu0 %v855, 32
        %v858 = vpop.permute.xlu0 %857
        %v860 = vadd.f32 %v850, %v858
        %v861 = vtanh.pop %v860
        %863 = vrot.lane.b32.xlu0 %v861, 64
        %v864 = vpop.permute.xlu0 %863
        %v866 = vmul.f32 %v848, %v864
        %868 = vrot.lane.b32.xlu0 %v866, 32
        %v869 = vpop.permute.xlu0 %868
        %871 = vst.msk [vmem:[#allocation2 + $0x3] sm:$0x1] %vm564, %v869
        %v872 = vld [vmem:[#allocation3 + $0x4] sm:$0x1]
        %v873 = vsel %vm373, %v869, 0
        %875 = vmatprep.subr.mxu0 0.0
        %876 = vmatpush1.msra.mxu0 %v448
        %877 = vmatprep.subr.mxu0 0.0
        %878 = vmatpush1.msra.mxu0 %v449
        %879 = vmatprep.subr.mxu0 0.0
        %880 = vmatpush1.msra.mxu0 %v450
        %881 = vmatprep.subr.mxu0 0.0
        %882 = vmatpush1.msra.mxu0 %v451
        %883 = vmatprep.subr.mxu0 0.0
        %884 = vmatpush1.msra.mxu0 0.0
        %885 = vmatprep.subr.mxu0 0.0
        %886 = vmatpush1.msra.mxu0 0.0
        %887 = vmatprep.subr.mxu0 0.0
        %888 = vmatpush1.msra.mxu0 0.0
        %889 = vmatprep.subr.mxu0 0.0
        %890 = vmatpush1.msra.mxu0 0.0
        %891 = vmatprep.subr.mxu0 0.0
        %892 = vmatpush1.msra.mxu0 0.0
        %893 = vmatprep.subr.mxu0 0.0
        %894 = vmatpush1.msra.mxu0 0.0
        %895 = vmatprep.subr.mxu0 0.0
        %896 = vmatpush1.msra.mxu0 0.0
        %897 = vmatprep.subr.mxu0 0.0
        %898 = vmatpush1.msra.mxu0 0.0
        %899 = vmatprep.subr.mxu0 0.0
        %900 = vmatpush1.msra.mxu0 0.0
        %901 = vmatprep.subr.mxu0 0.0
        %902 = vmatpush1.msra.mxu0 0.0
        %903 = vmatprep.subr.mxu0 0.0
        %904 = vmatpush1.msra.mxu0 0.0
        %905 = vmatprep.subr.mxu0 0.0
        %906 = vmatpush1.msra.mxu0 0.0
        %907 = vmatprep.subr.mxu0 0.0
        %908 = vmatpush1.msra.mxu0 0.0
        %909 = vmatprep.subr.mxu0 0.0
        %910 = vmatpush1.msra.mxu0 0.0
        %911 = vmatprep.subr.mxu0 0.0
        %912 = vmatpush1.msra.mxu0 0.0
        %913 = vmatprep.subr.mxu0 0.0
        %914 = vmatpush1.msra.mxu0 0.0
        %915 = vmatprep.subr.mxu0 0.0
        %916 = vmatpush1.msra.mxu0 0.0
        %917 = vmatprep.subr.mxu0 0.0
        %918 = vmatpush1.msra.mxu0 0.0
        %919 = vmatprep.subr.mxu0 0.0
        %920 = vmatpush1.msra.mxu0 0.0
        %921 = vmatprep.subr.mxu0 0.0
        %922 = vmatpush1.msra.mxu0 0.0
        %923 = vmatprep.subr.mxu0 0.0
        %924 = vmatpush1.msra.mxu0 0.0
        %925 = vmatprep.subr.mxu0 0.0
        %926 = vmatpush1.msra.mxu0 0.0
        %927 = vmatprep.subr.mxu0 0.0
        %928 = vmatpush1.msra.mxu0 0.0
        %929 = vmatprep.subr.mxu0 0.0
        %930 = vmatpush1.msra.mxu0 0.0
        %931 = vmatprep.subr.mxu0 0.0
        %932 = vmatpush1.msra.mxu0 0.0
        %933 = vmatprep.subr.mxu0 0.0
        %934 = vmatpush1.msra.mxu0 0.0
        %935 = vmatprep.subr.mxu0 0.0
        %936 = vmatpush1.msra.mxu0 0.0
        %937 = vmatprep.subr.mxu0 0.0
        %938 = vmatpush1.msra.mxu0 0.0
        %939 = vmatprep.mubr.f32.mxu0 0.0
        %940 = vmatmul.mubr.f32.gmra.mrb[0].mxu0 %v873
        %v941 = vpop.f32.mrb[0].mxu0
        %v942 = vadd.f32 0.0, %v941
        %v943 = vpop.f32.mrb[0].mxu0
        %944 = vdwg.mxu0
        %v945 = vadd.f32 %v872, %v942
        %v946 = vsub.f32 0.0, %v945
        %v947 = vmul.f32 %v946, 1.442695
        %v948 = vpow.pop %v947
        %v949 = vadd.f32 %v948, 1.0
        %v950 = vrcp.pop %v949
        %v951 = vtanh.pop %v945
        %v952 = vmul.f32 %v950, %v860
        %954 = vrot.lane.b32.xlu0 %v951, 64
        %v955 = vpop.permute.xlu0 %954
        %v957 = vmul.f32 %v950, %v955
        %959 = vrot.lane.b32.xlu0 %v957, 32
        %v960 = vpop.permute.xlu0 %959
        %v962 = vadd.f32 %v952, %v960
        %v963 = vtanh.pop %v962
        %965 = vrot.lane.b32.xlu0 %v963, 64
        %v966 = vpop.permute.xlu0 %965
        %v968 = vmul.f32 %v950, %v966
        %970 = vrot.lane.b32.xlu0 %v968, 32
        %v971 = vpop.permute.xlu0 %970
        %973 = vst.msk [vmem:[#allocation2 + $0x4] sm:$0x1] %vm564, %v971
        %v974 = vld [vmem:[#allocation3 + $0x5] sm:$0x1]
        %v975 = vsel %vm373, %v971, 0
        %977 = vmatprep.subr.mxu0 0.0
        %978 = vmatpush1.msra.mxu0 %v448
        %979 = vmatprep.subr.mxu0 0.0
        %980 = vmatpush1.msra.mxu0 %v449
        %981 = vmatprep.subr.mxu0 0.0
        %982 = vmatpush1.msra.mxu0 %v450
        %983 = vmatprep.subr.mxu0 0.0
        %984 = vmatpush1.msra.mxu0 %v451
        %985 = vmatprep.subr.mxu0 0.0
        %986 = vmatpush1.msra.mxu0 0.0
        %987 = vmatprep.subr.mxu0 0.0
        %988 = vmatpush1.msra.mxu0 0.0
        %989 = vmatprep.subr.mxu0 0.0
        %990 = vmatpush1.msra.mxu0 0.0
        %991 = vmatprep.subr.mxu0 0.0
        %992 = vmatpush1.msra.mxu0 0.0
        %993 = vmatprep.subr.mxu0 0.0
        %994 = vmatpush1.msra.mxu0 0.0
        %995 = vmatprep.subr.mxu0 0.0
        %996 = vmatpush1.msra.mxu0 0.0
        %997 = vmatprep.subr.mxu0 0.0
        %998 = vmatpush1.msra.mxu0 0.0
        %999 = vmatprep.subr.mxu0 0.0
        %1000 = vmatpush1.msra.mxu0 0.0
        %1001 = vmatprep.subr.mxu0 0.0
        %1002 = vmatpush1.msra.mxu0 0.0
        %1003 = vmatprep.subr.mxu0 0.0
        %1004 = vmatpush1.msra.mxu0 0.0
        %1005 = vmatprep.subr.mxu0 0.0
        %1006 = vmatpush1.msra.mxu0 0.0
        %1007 = vmatprep.subr.mxu0 0.0
        %1008 = vmatpush1.msra.mxu0 0.0
        %1009 = vmatprep.subr.mxu0 0.0
        %1010 = vmatpush1.msra.mxu0 0.0
        %1011 = vmatprep.subr.mxu0 0.0
        %1012 = vmatpush1.msra.mxu0 0.0
        %1013 = vmatprep.subr.mxu0 0.0
        %1014 = vmatpush1.msra.mxu0 0.0
        %1015 = vmatprep.subr.mxu0 0.0
        %1016 = vmatpush1.msra.mxu0 0.0
        %1017 = vmatprep.subr.mxu0 0.0
        %1018 = vmatpush1.msra.mxu0 0.0
        %1019 = vmatprep.subr.mxu0 0.0
        %1020 = vmatpush1.msra.mxu0 0.0
        %1021 = vmatprep.subr.mxu0 0.0
        %1022 = vmatpush1.msra.mxu0 0.0
        %1023 = vmatprep.subr.mxu0 0.0
        %1024 = vmatpush1.msra.mxu0 0.0
        %1025 = vmatprep.subr.mxu0 0.0
        %1026 = vmatpush1.msra.mxu0 0.0
        %1027 = vmatprep.subr.mxu0 0.0
        %1028 = vmatpush1.msra.mxu0 0.0
        %1029 = vmatprep.subr.mxu0 0.0
        %1030 = vmatpush1.msra.mxu0 0.0
        %1031 = vmatprep.subr.mxu0 0.0
        %1032 = vmatpush1.msra.mxu0 0.0
        %1033 = vmatprep.subr.mxu0 0.0
        %1034 = vmatpush1.msra.mxu0 0.0
        %1035 = vmatprep.subr.mxu0 0.0
        %1036 = vmatpush1.msra.mxu0 0.0
        %1037 = vmatprep.subr.mxu0 0.0
        %1038 = vmatpush1.msra.mxu0 0.0
        %1039 = vmatprep.subr.mxu0 0.0
        %1040 = vmatpush1.msra.mxu0 0.0
        %1041 = vmatprep.mubr.f32.mxu0 0.0
        %1042 = vmatmul.mubr.f32.gmra.mrb[0].mxu0 %v975
        %v1043 = vpop.f32.mrb[0].mxu0
        %v1044 = vadd.f32 0.0, %v1043
        %v1045 = vpop.f32.mrb[0].mxu0
        %1046 = vdwg.mxu0
        %v1047 = vadd.f32 %v974, %v1044
        %v1048 = vsub.f32 0.0, %v1047
        %v1049 = vmul.f32 %v1048, 1.442695
        %v1050 = vpow.pop %v1049
        %v1051 = vadd.f32 %v1050, 1.0
        %v1052 = vrcp.pop %v1051
        %v1053 = vtanh.pop %v1047
        %v1054 = vmul.f32 %v1052, %v962
        %1056 = vrot.lane.b32.xlu0 %v1053, 64
        %v1057 = vpop.permute.xlu0 %1056
        %v1059 = vmul.f32 %v1052, %v1057
        %1061 = vrot.lane.b32.xlu0 %v1059, 32
        %v1062 = vpop.permute.xlu0 %1061
        %v1064 = vadd.f32 %v1054, %v1062
        %v1065 = vtanh.pop %v1064
        %1067 = vrot.lane.b32.xlu0 %v1065, 64
        %v1068 = vpop.permute.xlu0 %1067
        %v1070 = vmul.f32 %v1052, %v1068
        %1072 = vrot.lane.b32.xlu0 %v1070, 32
        %v1073 = vpop.permute.xlu0 %1072
        %1075 = vst.msk [vmem:[#allocation2 + $0x5] sm:$0x1] %vm564, %v1073
        %v1076 = vld [vmem:[#allocation3 + $0x6] sm:$0x1]
        %v1077 = vsel %vm373, %v1073, 0
        %1079 = vmatprep.subr.mxu0 0.0
        %1080 = vmatpush1.msra.mxu0 %v448
        %1081 = vmatprep.subr.mxu0 0.0
        %1082 = vmatpush1.msra.mxu0 %v449
        %1083 = vmatprep.subr.mxu0 0.0
        %1084 = vmatpush1.msra.mxu0 %v450
        %1085 = vmatprep.subr.mxu0 0.0
        %1086 = vmatpush1.msra.mxu0 %v451
        %1087 = vmatprep.subr.mxu0 0.0
        %1088 = vmatpush1.msra.mxu0 0.0
        %1089 = vmatprep.subr.mxu0 0.0
        %1090 = vmatpush1.msra.mxu0 0.0
        %1091 = vmatprep.subr.mxu0 0.0
        %1092 = vmatpush1.msra.mxu0 0.0
        %1093 = vmatprep.subr.mxu0 0.0
        %1094 = vmatpush1.msra.mxu0 0.0
        %1095 = vmatprep.subr.mxu0 0.0
        %1096 = vmatpush1.msra.mxu0 0.0
        %1097 = vmatprep.subr.mxu0 0.0
        %1098 = vmatpush1.msra.mxu0 0.0
        %1099 = vmatprep.subr.mxu0 0.0
        %1100 = vmatpush1.msra.mxu0 0.0
        %1101 = vmatprep.subr.mxu0 0.0
        %1102 = vmatpush1.msra.mxu0 0.0
        %1103 = vmatprep.subr.mxu0 0.0
        %1104 = vmatpush1.msra.mxu0 0.0
        %1105 = vmatprep.subr.mxu0 0.0
        %1106 = vmatpush1.msra.mxu0 0.0
        %1107 = vmatprep.subr.mxu0 0.0
        %1108 = vmatpush1.msra.mxu0 0.0
        %1109 = vmatprep.subr.mxu0 0.0
        %1110 = vmatpush1.msra.mxu0 0.0
        %1111 = vmatprep.subr.mxu0 0.0
        %1112 = vmatpush1.msra.mxu0 0.0
        %1113 = vmatprep.subr.mxu0 0.0
        %1114 = vmatpush1.msra.mxu0 0.0
        %1115 = vmatprep.subr.mxu0 0.0
        %1116 = vmatpush1.msra.mxu0 0.0
        %1117 = vmatprep.subr.mxu0 0.0
        %1118 = vmatpush1.msra.mxu0 0.0
        %1119 = vmatprep.subr.mxu0 0.0
        %1120 = vmatpush1.msra.mxu0 0.0
        %1121 = vmatprep.subr.mxu0 0.0
        %1122 = vmatpush1.msra.mxu0 0.0
        %1123 = vmatprep.subr.mxu0 0.0
        %1124 = vmatpush1.msra.mxu0 0.0
        %1125 = vmatprep.subr.mxu0 0.0
        %1126 = vmatpush1.msra.mxu0 0.0
        %1127 = vmatprep.subr.mxu0 0.0
        %1128 = vmatpush1.msra.mxu0 0.0
        %1129 = vmatprep.subr.mxu0 0.0
        %1130 = vmatpush1.msra.mxu0 0.0
        %1131 = vmatprep.subr.mxu0 0.0
        %1132 = vmatpush1.msra.mxu0 0.0
        %1133 = vmatprep.subr.mxu0 0.0
        %1134 = vmatpush1.msra.mxu0 0.0
        %1135 = vmatprep.subr.mxu0 0.0
        %1136 = vmatpush1.msra.mxu0 0.0
        %1137 = vmatprep.subr.mxu0 0.0
        %1138 = vmatpush1.msra.mxu0 0.0
        %1139 = vmatprep.subr.mxu0 0.0
        %1140 = vmatpush1.msra.mxu0 0.0
        %1141 = vmatprep.subr.mxu0 0.0
        %1142 = vmatpush1.msra.mxu0 0.0
        %1143 = vmatprep.mubr.f32.mxu0 0.0
        %1144 = vmatmul.mubr.f32.gmra.mrb[0].mxu0 %v1077
        %v1145 = vpop.f32.mrb[0].mxu0
        %v1146 = vadd.f32 0.0, %v1145
        %v1147 = vpop.f32.mrb[0].mxu0
        %1148 = vdwg.mxu0
        %v1149 = vadd.f32 %v1076, %v1146
        %v1150 = vsub.f32 0.0, %v1149
        %v1151 = vmul.f32 %v1150, 1.442695
        %v1152 = vpow.pop %v1151
        %v1153 = vadd.f32 %v1152, 1.0
        %v1154 = vrcp.pop %v1153
        %v1155 = vtanh.pop %v1149
        %v1156 = vmul.f32 %v1154, %v1064
        %1158 = vrot.lane.b32.xlu0 %v1155, 64
        %v1159 = vpop.permute.xlu0 %1158
        %v1161 = vmul.f32 %v1154, %v1159
        %1163 = vrot.lane.b32.xlu0 %v1161, 32
        %v1164 = vpop.permute.xlu0 %1163
        %v1166 = vadd.f32 %v1156, %v1164
        %v1167 = vtanh.pop %v1166
        %1169 = vrot.lane.b32.xlu0 %v1167, 64
        %v1170 = vpop.permute.xlu0 %1169
        %v1172 = vmul.f32 %v1154, %v1170
        %1174 = vrot.lane.b32.xlu0 %v1172, 32
        %v1175 = vpop.permute.xlu0 %1174
        %1177 = vst.msk [vmem:[#allocation2 + $0x6] sm:$0x1] %vm564, %v1175
        %v1178 = vld [vmem:[#allocation3 + $0x7] sm:$0x1]
        %v1179 = vsel %vm373, %v1175, 0
        %1181 = vmatprep.subr.mxu0 0.0
        %1182 = vmatpush1.msra.mxu0 %v448
        %1183 = vmatprep.subr.mxu0 0.0
        %1184 = vmatpush1.msra.mxu0 %v449
        %1185 = vmatprep.subr.mxu0 0.0
        %1186 = vmatpush1.msra.mxu0 %v450
        %1187 = vmatprep.subr.mxu0 0.0
        %1188 = vmatpush1.msra.mxu0 %v451
        %1189 = vmatprep.subr.mxu0 0.0
        %1190 = vmatpush1.msra.mxu0 0.0
        %1191 = vmatprep.subr.mxu0 0.0
        %1192 = vmatpush1.msra.mxu0 0.0
        %1193 = vmatprep.subr.mxu0 0.0
        %1194 = vmatpush1.msra.mxu0 0.0
        %1195 = vmatprep.subr.mxu0 0.0
        %1196 = vmatpush1.msra.mxu0 0.0
        %1197 = vmatprep.subr.mxu0 0.0
        %1198 = vmatpush1.msra.mxu0 0.0
        %1199 = vmatprep.subr.mxu0 0.0
        %1200 = vmatpush1.msra.mxu0 0.0
        %1201 = vmatprep.subr.mxu0 0.0
        %1202 = vmatpush1.msra.mxu0 0.0
        %1203 = vmatprep.subr.mxu0 0.0
        %1204 = vmatpush1.msra.mxu0 0.0
        %1205 = vmatprep.subr.mxu0 0.0
        %1206 = vmatpush1.msra.mxu0 0.0
        %1207 = vmatprep.subr.mxu0 0.0
        %1208 = vmatpush1.msra.mxu0 0.0
        %1209 = vmatprep.subr.mxu0 0.0
        %1210 = vmatpush1.msra.mxu0 0.0
        %1211 = vmatprep.subr.mxu0 0.0
        %1212 = vmatpush1.msra.mxu0 0.0
        %1213 = vmatprep.subr.mxu0 0.0
        %1214 = vmatpush1.msra.mxu0 0.0
        %1215 = vmatprep.subr.mxu0 0.0
        %1216 = vmatpush1.msra.mxu0 0.0
        %1217 = vmatprep.subr.mxu0 0.0
        %1218 = vmatpush1.msra.mxu0 0.0
        %1219 = vmatprep.subr.mxu0 0.0
        %1220 = vmatpush1.msra.mxu0 0.0
        %1221 = vmatprep.subr.mxu0 0.0
        %1222 = vmatpush1.msra.mxu0 0.0
        %1223 = vmatprep.subr.mxu0 0.0
        %1224 = vmatpush1.msra.mxu0 0.0
        %1225 = vmatprep.subr.mxu0 0.0
        %1226 = vmatpush1.msra.mxu0 0.0
        %1227 = vmatprep.subr.mxu0 0.0
        %1228 = vmatpush1.msra.mxu0 0.0
        %1229 = vmatprep.subr.mxu0 0.0
        %1230 = vmatpush1.msra.mxu0 0.0
        %1231 = vmatprep.subr.mxu0 0.0
        %1232 = vmatpush1.msra.mxu0 0.0
        %1233 = vmatprep.subr.mxu0 0.0
        %1234 = vmatpush1.msra.mxu0 0.0
        %1235 = vmatprep.subr.mxu0 0.0
        %1236 = vmatpush1.msra.mxu0 0.0
        %1237 = vmatprep.subr.mxu0 0.0
        %1238 = vmatpush1.msra.mxu0 0.0
        %1239 = vmatprep.subr.mxu0 0.0
        %1240 = vmatpush1.msra.mxu0 0.0
        %1241 = vmatprep.subr.mxu0 0.0
        %1242 = vmatpush1.msra.mxu0 0.0
        %1243 = vmatprep.subr.mxu0 0.0
        %1244 = vmatpush1.msra.mxu0 0.0
        %1245 = vmatprep.mubr.f32.mxu0 0.0
        %1246 = vmatmul.mubr.f32.gmra.mrb[0].mxu0 %v1179
        %v1247 = vpop.f32.mrb[0].mxu0
        %v1248 = vadd.f32 0.0, %v1247
        %v1249 = vpop.f32.mrb[0].mxu0
        %1250 = vdwg.mxu0
        %v1251 = vadd.f32 %v1178, %v1248
        %v1252 = vsub.f32 0.0, %v1251
        %v1253 = vmul.f32 %v1252, 1.442695
        %v1254 = vpow.pop %v1253
        %v1255 = vadd.f32 %v1254, 1.0
        %v1256 = vrcp.pop %v1255
        %v1257 = vtanh.pop %v1251
        %v1258 = vmul.f32 %v1256, %v1166
        %1260 = vrot.lane.b32.xlu0 %v1257, 64
        %v1261 = vpop.permute.xlu0 %1260
        %v1263 = vmul.f32 %v1256, %v1261
        %1265 = vrot.lane.b32.xlu0 %v1263, 32
        %v1266 = vpop.permute.xlu0 %1265
        %v1268 = vadd.f32 %v1258, %v1266
        %v1269 = vtanh.pop %v1268
        %1271 = vrot.lane.b32.xlu0 %v1269, 64
        %v1272 = vpop.permute.xlu0 %1271
        %v1274 = vmul.f32 %v1256, %v1272
        %1276 = vrot.lane.b32.xlu0 %v1274, 32
        %v1277 = vpop.permute.xlu0 %1276
        %1279 = vst.msk [vmem:[#allocation2 + $0x7] sm:$0x1] %vm564, %v1277
        %p1280 = scmp.eq.s32.totalorder %s20, 1
        // Predicated region
        $region57: #{lstm_forward.1} parent=51 // pred_check
          %p1281 = pneg %p1280
        $region58: #{lstm_forward.1} parent=51 // pred_check_branch
          %1283 = sbr.rel (%p1281) target = $region60
        $region59: #{lstm_forward.1} parent=51 // pred_region
          %v1284 = vld [vmem:[#allocation2] sm:$0xff]
          %v1285 = vld [vmem:[%s4] sm:$0xff]
          %v1286 = vld [vmem:[%s4 + $0x8] sm:$0xff]
          %v1287 = vld [vmem:[%s4 + $0x10] sm:$0xff]
          %v1288 = vld [vmem:[%s4 + $0x18] sm:$0xff]
          %v1289 = vld [vmem:[%s5] sm:$0x1]
          %v1291 = vlaneseq
          %v1292 = vshrl.u32 %v1291, 7
          %v1293 = vsub.s32 0, %v1292
          %v1294 = vrot.slane %v1289, %v1293
          %v1297 = vsel %vm373, %v1284, 0
          %1299 = vmatprep.subr.mxu0 0.0
          %1300 = vmatpush1.msra.mxu0 %v1285
          %1301 = vmatprep.subr.mxu0 0.0
          %1302 = vmatpush1.msra.mxu0 %v1286
          %1303 = vmatprep.subr.mxu0 0.0
          %1304 = vmatpush1.msra.mxu0 %v1287
          %1305 = vmatprep.subr.mxu0 0.0
          %1306 = vmatpush1.msra.mxu0 %v1288
          %1307 = vmatprep.subr.mxu0 0.0
          %1308 = vmatpush1.msra.mxu0 0.0
          %1309 = vmatprep.subr.mxu0 0.0
          %1310 = vmatpush1.msra.mxu0 0.0
          %1311 = vmatprep.subr.mxu0 0.0
          %1312 = vmatpush1.msra.mxu0 0.0
          %1313 = vmatprep.subr.mxu0 0.0
          %1314 = vmatpush1.msra.mxu0 0.0
          %1315 = vmatprep.subr.mxu0 0.0
          %1316 = vmatpush1.msra.mxu0 0.0
          %1317 = vmatprep.subr.mxu0 0.0
          %1318 = vmatpush1.msra.mxu0 0.0
          %1319 = vmatprep.subr.mxu0 0.0
          %1320 = vmatpush1.msra.mxu0 0.0
          %1321 = vmatprep.subr.mxu0 0.0
          %1322 = vmatpush1.msra.mxu0 0.0
          %1323 = vmatprep.subr.mxu0 0.0
          %1324 = vmatpush1.msra.mxu0 0.0
          %1325 = vmatprep.subr.mxu0 0.0
          %1326 = vmatpush1.msra.mxu0 0.0
          %1327 = vmatprep.subr.mxu0 0.0
          %1328 = vmatpush1.msra.mxu0 0.0
          %1329 = vmatprep.subr.mxu0 0.0
          %1330 = vmatpush1.msra.mxu0 0.0
          %1331 = vmatprep.subr.mxu0 0.0
          %1332 = vmatpush1.msra.mxu0 0.0
          %1333 = vmatprep.subr.mxu0 0.0
          %1334 = vmatpush1.msra.mxu0 0.0
          %1335 = vmatprep.subr.mxu0 0.0
          %1336 = vmatpush1.msra.mxu0 0.0
          %1337 = vmatprep.subr.mxu0 0.0
          %1338 = vmatpush1.msra.mxu0 0.0
          %1339 = vmatprep.subr.mxu0 0.0
          %1340 = vmatpush1.msra.mxu0 0.0
          %1341 = vmatprep.subr.mxu0 0.0
          %1342 = vmatpush1.msra.mxu0 0.0
          %1343 = vmatprep.subr.mxu0 0.0
          %1344 = vmatpush1.msra.mxu0 0.0
          %1345 = vmatprep.subr.mxu0 0.0
          %1346 = vmatpush1.msra.mxu0 0.0
          %1347 = vmatprep.subr.mxu0 0.0
          %1348 = vmatpush1.msra.mxu0 0.0
          %1349 = vmatprep.subr.mxu0 0.0
          %1350 = vmatpush1.msra.mxu0 0.0
          %1351 = vmatprep.subr.mxu0 0.0
          %1352 = vmatpush1.msra.mxu0 0.0
          %1353 = vmatprep.subr.mxu0 0.0
          %1354 = vmatpush1.msra.mxu0 0.0
          %1355 = vmatprep.subr.mxu0 0.0
          %1356 = vmatpush1.msra.mxu0 0.0
          %1357 = vmatprep.subr.mxu0 0.0
          %1358 = vmatpush1.msra.mxu0 0.0
          %1359 = vmatprep.subr.mxu0 0.0
          %1360 = vmatpush1.msra.mxu0 0.0
          %1361 = vmatprep.subr.mxu0 0.0
          %1362 = vmatpush1.msra.mxu0 0.0
          %1363 = vmatprep.mubr.f32.mxu0 0.0
          %1364 = vmatmul.mubr.f32.gmra.mrb[0].mxu0 %v1297
          %v1365 = vpop.f32.mrb[0].mxu0
          %v1366 = vadd.f32 %v1294, %v1365
          %v1367 = vpop.f32.mrb[0].mxu0
          %1368 = vdwg.mxu0
          %v1369 = vlaneseq
          %v1370 = vand.u32 %v1369, 127
          %vm1371 = vcmp.lt.s32.totalorder %v1370, 10
          %v1372 = vsel %vm1371, %v1366, -1e+30
          %1373 = vmax.xlane.f32.xlu0 %v1372
          %v1374 = vpop.xlane.xlu0 %1373
          %v1375 = vsub.f32 %v1372, %v1374
          %v1376 = vmul.f32 %v1375, 1.442695
          %v1377 = vpow.pop %v1376
          %1378 = vadd.xlane.f32.xlu0 %v1377
          %v1379 = vpop.xlane.xlu0 %1378
          %v1380 = vlog2.pop %v1379
          %v1381 = vmul.f32 %v1380, 0.6931472
          %v1382 = vsub.f32 %v1375, %v1381
          %1383 = vst [vmem:[#allocation4] sm:$0xff] %v1382
        $region60: #{lstm_forward.1} parent=51 // pred_fallthru
          _
        // Predicated region
        $region61: #{lstm_forward.1} parent=51 // pred_check
          %p1384 = pneg %p226
        $region62: #{lstm_forward.1} parent=51 // pred_check_branch
          %1386 = sbr.rel (%p1384) target = $region64
        $region63: #{lstm_forward.1} parent=51 // pred_region
          %s1388 = ssub.s32 128, 128
          %1389 = vsyncadd [#allocation5], %s1388
          %s1391 = sshll.u32 [#allocation4], 4
          %s1392 = int_to_ptr.vmem [resolvable:$true] %s1391
          %1394 = dma.vmem_to_hbm [thread:$0]  %s1392, 128, %s8, [#allocation5]
        $region64: #{lstm_forward.1} parent=51 // pred_fallthru
          _
        // Predicated region
        $region65: #{lstm_forward.1} parent=51 // pred_check
          %p1395 = pneg %p226
        $region66: #{lstm_forward.1} parent=51 // pred_check_branch
          %1397 = sbr.rel (%p1395) target = $region68
        $region67: #{lstm_forward.1} parent=51 // pred_region
          %1398 = dma.done [#allocation5], 128
        $region68: #{lstm_forward.1} parent=51 // pred_fallthru
          _
      $region52: #{lstm_forward.1} parent=5 // pred_fallthru
        _
      %p1399 = scmp.le.s32.totalorder 2, %s15
      // Predicated region
      $region69: #{lstm_forward.1} parent=5 // pred_check
        %p1400 = pneg %p1399
      $region70: #{lstm_forward.1} parent=5 // pred_check_branch
        %1402 = sbr.rel (%p1400) target = $region72
      $region71: #{lstm_forward.1} parent=5 // pred_region
        %s1403 = ssub.s32 %s15, 2
      $region72: #{lstm_forward.1} parent=5 // pred_fallthru
        _
    $region6: #{lstm_forward.1} parent=1 // loop_footer
      %s19 = sadd.s32 1, %s15
    $region7: #{lstm_forward.1} parent=1 // loop_footer_branch
      %14 = sbr.rel target = $region3
    $region8: #{lstm_forward.1} parent=1 // loop_exit
      _
    %1404 = vsyncpa [#allocation5], 1
    %s1405 = scalar_lea.sflag [#allocation5], 1
    %1406 = vsyncpa %s1405, 1

</llo_original>
